<compile_context>
chip_gen: v5e
topology: v5e:2x2
jax: 0.10.0
libtpu: 0.0.40
codegen_flags: <defaults>
</compile_context>

<pallas_src>
import functools
import math

import jax
import jax.numpy as jnp
from jax.experimental import pallas as pl
from jax.experimental.pallas import tpu as pltpu


CFG = dict(vocab=100, max_pos=64, hidden=32, n_heads=4, n_layers=2,
           ffn=64, num_labels=3)
LANE_PAD = 128          # lane-dense width of the classifier output slab


# ---------------------------------------------------------------------------
# In-kernel helpers (f32 epilogue math)
# ---------------------------------------------------------------------------

def _layernorm(x, g, b, eps=1e-5):
    mu = jnp.mean(x, axis=-1, keepdims=True)
    xc = x - mu
    var = jnp.mean(xc * xc, axis=-1, keepdims=True)
    return xc * jax.lax.rsqrt(var + eps) * g + b


def _gelu_tanh(x):
    # TODO(synk): exact erf-GELU if bit-exact parity with HF roberta is needed.
    c = math.sqrt(2.0 / math.pi)
    return 0.5 * x * (1.0 + jnp.tanh(c * (x + 0.044715 * x * x * x)))


# ---------------------------------------------------------------------------
# Fused kernel: one grid point == one batch element's full forward pass
# ---------------------------------------------------------------------------

def bert_fused_kernel(emb_ref, mask_ref, emb_ln_ref,
                      wqkv_ref, bqkv_ref, wo_ref, w1_ref, b1_ref, w2_ref,
                      vec_ref, wf1_ref, bf1_ref, wf2_ref, bf2_ref,
                      out_ref, *, seq, n_heads, head_dim, n_layers):
    H = n_heads * head_dim
    f32 = jnp.float32
    bf16 = jnp.bfloat16

    # Post-embedding LayerNorm.
    x = _layernorm(emb_ref[...], emb_ln_ref[0:1, :], emb_ln_ref[1:2, :])   # (S,H)

    # Additive key-mask broadcast ONCE (hoisted; JAX does not CSE broadcasts).
    mask_full = jnp.broadcast_to(mask_ref[...], (n_heads, seq, seq))       # (nH,S,S)

    # Static unroll is fine at n_layers=2 (see TODO at the top for 12+ layers).
    for l in range(n_layers):
        xb = x.astype(bf16)
        xh = jnp.broadcast_to(xb[None], (n_heads, seq, H))                 # (nH,S,H)

        # Per-head Q/K/V projections as batched MXU matmuls over the leading
        # head axis (no lane-offset slicing). wq/bq pre-scaled by 1/sqrt(dh).
        q = jnp.einsum('nsh,nhd->nsd', xh, wqkv_ref[3 * l + 0],
                       preferred_element_type=f32) + bqkv_ref[3 * l + 0]
        k = jnp.einsum('nsh,nhd->nsd', xh, wqkv_ref[3 * l + 1],
                       preferred_element_type=f32) + bqkv_ref[3 * l + 1]
        v = jnp.einsum('nsh,nhd->nsd', xh, wqkv_ref[3 * l + 2],
                       preferred_element_type=f32) + bqkv_ref[3 * l + 2]

        # Scores + softmax for all heads at once (f32).
        s = jnp.einsum('nsd,ntd->nst', q.astype(bf16), k.astype(bf16),
                       preferred_element_type=f32) + mask_full
        s = s - jnp.max(s, axis=-1, keepdims=True)
        p = jnp.exp(s)
        denom = jnp.sum(p, axis=-1, keepdims=True)                         # (nH,S,1)

        # Context; normalize the smaller (S,dh) operand AFTER the matmul.
        ctx = jnp.einsum('nst,ntd->nsd', p.astype(bf16), v.astype(bf16),
                         preferred_element_type=f32)
        ctx = ctx * pl.reciprocal(denom, approx=True)

        # Output projection: batched over heads, summed over the head axis
        # (equivalent to concat(ctx_h) @ wo, with no transpose/relayout).
        attn = jnp.einsum('nsd,ndh->nsh', ctx.astype(bf16), wo_ref[l],
                          preferred_element_type=f32).sum(axis=0)          # (S,H)

        vec = vec_ref[l]            # (6,H): bo, ln1_g, ln1_b, b2, ln2_g, ln2_b
        x = _layernorm(x + attn + vec[0:1, :], vec[1:2, :], vec[2:3, :])

        # FFN + residual + post-LN (fused epilogues, no scratch round-trip).
        hdn = _gelu_tanh(jnp.dot(x.astype(bf16), w1_ref[l],
                                 preferred_element_type=f32) + b1_ref[l])
        ffn = jnp.dot(hdn.astype(bf16), w2_ref[l],
                      preferred_element_type=f32) + vec[3:4, :]
        x = _layernorm(x + ffn, vec[4:5, :], vec[5:6, :])

    # Classifier head on the CLS row only: fc1 -> ReLU -> dropout (identity in
    # eval) -> fc2 -> sigmoid, into a lane-dense (1,128) slab.
    cls = x[0:1, :]
    h1 = jnp.maximum(jnp.dot(cls.astype(bf16), wf1_ref[...],
                             preferred_element_type=f32) + bf1_ref[...], 0.0)
    logits = jnp.dot(h1.astype(bf16), wf2_ref[...],
                     preferred_element_type=f32) + bf2_ref[...]
    # Exact f32 divide keeps probs strictly in [0,1]; single (1,128) op.
    out_ref[...] = (1.0 / (1.0 + jnp.exp(-logits))).reshape(out_ref.shape)


# ---------------------------------------------------------------------------
# Wrapper
# ---------------------------------------------------------------------------

def fused_forward(packed, emb, mask_bias, cfg, batch, seq):
    H = cfg["hidden"]
    nH = cfg["n_heads"]
    kern = functools.partial(bert_fused_kernel, seq=seq, n_heads=nH,
                             head_dim=H // nH, n_layers=cfg["n_layers"])
    resident = pl.BlockSpec(memory_space=pltpu.MemorySpace.VMEM)   # whole array
    return pl.pallas_call(
        kern,
        grid=(batch,),
        out_shape=jax.ShapeDtypeStruct((batch, 1, LANE_PAD), jnp.float32),
        in_specs=[pl.BlockSpec((seq, H), lambda b: (b, 0)),         # embeddings
                  pl.BlockSpec((1, 1, seq), lambda b: (b, 0, 0))]   # mask bias
                 + [resident] * 12,                                 # weights
        out_specs=pl.BlockSpec((1, 1, LANE_PAD), lambda b: (b, 0, 0)),
        compiler_params=pltpu.CompilerParams(
            dimension_semantics=("parallel",)),
    )(emb, mask_bias,
      packed["emb_ln"], packed["wqkv"], packed["bqkv"], packed["wo"],
      packed["w1"], packed["b1"], packed["w2"], packed["vecs"],
      packed["w_fc1"], packed["b_fc1"], packed["w_fc2"], packed["b_fc2"])


def bert_model_forward(packed, input_ids, attention_mask, cfg):
    B, S = input_ids.shape
    H = cfg["hidden"]

    # Embedding gathers are glue (outside the kernel).
    emb = (packed["word_emb"][input_ids]
           + packed["pos_emb"][jnp.arange(S)][None, :, :]
           + packed["type_emb"][0][None, None, :]).reshape(B * S, H)

    # Additive attention-mask bias over keys, shape (B, 1, S).
    mask_bias = ((1.0 - attention_mask.astype(jnp.float32)) * -1e9).reshape(B, 1, S)

    probs_all = fused_forward(packed, emb, mask_bias, cfg, B, S)   # (B,1,128)
    # pooled = last_hidden_state[:, 0] (CLS); real labels are cols [:num_labels].
    return probs_all.reshape(B, LANE_PAD)[:, :cfg["num_labels"]]


# ---------------------------------------------------------------------------
# Parameters (deterministic random stand-in for the pretrained checkpoint)
# ---------------------------------------------------------------------------

def init_params(key, cfg):
    keys = iter(jax.random.split(key, 128))

    def nrm(shape, s=0.02):
        return (s * jax.random.normal(next(keys), shape)).astype(jnp.float32)

    H, F = cfg["hidden"], cfg["ffn"]
    params = {
        "word_emb": nrm((cfg["vocab"], H)),
        "pos_emb": nrm((cfg["max_pos"], H)),
        "type_emb": nrm((1, H)),
        "emb_ln_g": jnp.ones((H,), jnp.float32),
        "emb_ln_b": jnp.zeros((H,), jnp.float32),
        "layers": [],
        "w_fc1": nrm((H, 256)),
        "b_fc1": jnp.zeros((256,), jnp.float32),
        "w_fc2": nrm((256, cfg["num_labels"])),
        "b_fc2": jnp.zeros((cfg["num_labels"],), jnp.float32),
    }
    for _ in range(cfg["n_layers"]):
        params["layers"].append({
            "wq": nrm((H, H)), "bq": jnp.zeros((H,), jnp.float32),
            "wk": nrm((H, H)), "bk": jnp.zeros((H,), jnp.float32),
            "wv": nrm((H, H)), "bv": jnp.zeros((H,), jnp.float32),
            "wo": nrm((H, H)), "bo": jnp.zeros((H,), jnp.float32),
            "ln1_g": jnp.ones((H,), jnp.float32),
            "ln1_b": jnp.zeros((H,), jnp.float32),
            "w1": nrm((H, F)), "b1": jnp.zeros((F,), jnp.float32),
            "w2": nrm((F, H)), "b2": jnp.zeros((H,), jnp.float32),
            "ln2_g": jnp.ones((H,), jnp.float32),
            "ln2_b": jnp.zeros((H,), jnp.float32),
        })
    return params


def pack_params(raw, cfg):
    """Pre-split heads, fold 1/sqrt(dh) into q, cast matmul weights to bf16,
    stack per-layer vectors, pad fc2 to a lane-dense width."""
    H, F = cfg["hidden"], cfg["ffn"]
    nH = cfg["n_heads"]
    dh = H // nH
    scale = 1.0 / math.sqrt(dh)
    layers = raw["layers"]
    bf16 = jnp.bfloat16

    def head_w(w):          # (H, H) -> (nH, H, dh); head h = output cols h*dh:(h+1)*dh
        return jnp.transpose(w.reshape(H, nH, dh), (1, 0, 2))

    def head_b(b):          # (H,) -> (nH, 1, dh)
        return b.reshape(nH, 1, dh)

    packed = {
        "word_emb": raw["word_emb"],
        "pos_emb": raw["pos_emb"],
        "type_emb": raw["type_emb"],
        "emb_ln": jnp.stack([raw["emb_ln_g"], raw["emb_ln_b"]]),          # (2,H)
        # (3L, nH, H, dh) bf16, layer-major / q,k,v-minor; q pre-scaled.
        "wqkv": jnp.stack([head_w(w) for p in layers
                           for w in (p["wq"] * scale, p["wk"], p["wv"])]).astype(bf16),
        # (3L, nH, 1, dh) f32 biases (added to the f32 accumulation).
        "bqkv": jnp.stack([head_b(b) for p in layers
                           for b in (p["bq"] * scale, p["bk"], p["bv"])]),
        "wo": jnp.stack([p["wo"].reshape(nH, dh, H) for p in layers]).astype(bf16),
        "w1": jnp.stack([p["w1"] for p in layers]).astype(bf16),          # (L,H,F)
        "b1": jnp.stack([p["b1"][None, :] for p in layers]),              # (L,1,F)
        "w2": jnp.stack([p["w2"] for p in layers]).astype(bf16),          # (L,F,H)
        # (L,6,H) f32: bo, ln1_g, ln1_b, b2, ln2_g, ln2_b
        "vecs": jnp.stack([jnp.stack([p["bo"], p["ln1_g"], p["ln1_b"],
                                      p["b2"], p["ln2_g"], p["ln2_b"]])
                           for p in layers]),
        "w_fc1": raw["w_fc1"].astype(bf16),
        "b_fc1": raw["b_fc1"].reshape(1, -1),
    }
    # Pad the classifier output to a lane-dense width (avoids vst.msk stores).
    nl = cfg["num_labels"]
    w_fc2 = jnp.zeros((raw["w_fc2"].shape[0], LANE_PAD), jnp.float32)
    w_fc2 = w_fc2.at[:, :nl].set(raw["w_fc2"])
    packed["w_fc2"] = w_fc2.astype(bf16)
    packed["b_fc2"] = jnp.zeros((1, LANE_PAD), jnp.float32).at[0, :nl].set(raw["b_fc2"])
    return packed


# ---------------------------------------------------------------------------

if __name__ == "__main__":
    key = jax.random.PRNGKey(0)
    pkey, ikey = jax.random.split(key)

    raw_params = init_params(pkey, CFG)
    packed = pack_params(raw_params, CFG)

    B, S = 2, 8
    input_ids = jax.random.randint(ikey, (B, S), 0, CFG["vocab"], dtype=jnp.int32)
    attention_mask = jnp.ones((B, S), dtype=jnp.int32).at[1, 6:].set(0)

    probs = bert_model_forward(packed, input_ids, attention_mask, CFG)
    probs = jax.block_until_ready(probs)

    assert probs.shape == (B, CFG["num_labels"])
    assert bool(jnp.all(jnp.isfinite(probs)))
    assert bool(jnp.all((probs >= 0.0) & (probs <= 1.0)))
    print("KERNEL_OK")
</pallas_src>

<mosaic_0001>
module attributes {stable_mosaic.version = 11 : i64} {
  func.func @bert_fused_kernel(%arg0: i32, %arg1: memref<8x32xf32, #tpu.memory_space<vmem>>, %arg2: memref<1x1x8xf32, #tpu.memory_space<vmem>>, %arg3: memref<2x32xf32, #tpu.memory_space<vmem>>, %arg4: memref<6x4x32x8xbf16, #tpu.memory_space<vmem>>, %arg5: memref<6x4x1x8xf32, #tpu.memory_space<vmem>>, %arg6: memref<2x4x8x32xbf16, #tpu.memory_space<vmem>>, %arg7: memref<2x32x64xbf16, #tpu.memory_space<vmem>>, %arg8: memref<2x1x64xf32, #tpu.memory_space<vmem>>, %arg9: memref<2x64x32xbf16, #tpu.memory_space<vmem>>, %arg10: memref<2x6x32xf32, #tpu.memory_space<vmem>>, %arg11: memref<32x256xbf16, #tpu.memory_space<vmem>>, %arg12: memref<1x256xf32, #tpu.memory_space<vmem>>, %arg13: memref<256x128xbf16, #tpu.memory_space<vmem>>, %arg14: memref<1x128xf32, #tpu.memory_space<vmem>>, %arg15: memref<1x1x128xf32, #tpu.memory_space<vmem>>) attributes {dimension_semantics = [#tpu.dimension_semantics<parallel>], iteration_bounds = array<i64: 2>, scalar_prefetch = 0 : i64, scratch_operands = 0 : i64, tpu.core_type = #tpu.core_type<tc>, window_params = [{transform_indices = @transform_0, window_bounds = array<i64: 8, 32>}, {transform_indices = @transform_1, window_bounds = array<i64: 1, 1, 8>}, {pipeline_mode = #tpu.pipeline_mode<synchronous>, transform_indices = @transform_2, window_bounds = array<i64: 2, 32>}, {pipeline_mode = #tpu.pipeline_mode<synchronous>, transform_indices = @transform_3, window_bounds = array<i64: 6, 4, 32, 8>}, {pipeline_mode = #tpu.pipeline_mode<synchronous>, transform_indices = @transform_4, window_bounds = array<i64: 6, 4, 1, 8>}, {pipeline_mode = #tpu.pipeline_mode<synchronous>, transform_indices = @transform_5, window_bounds = array<i64: 2, 4, 8, 32>}, {pipeline_mode = #tpu.pipeline_mode<synchronous>, transform_indices = @transform_6, window_bounds = array<i64: 2, 32, 64>}, {pipeline_mode = #tpu.pipeline_mode<synchronous>, transform_indices = @transform_7, window_bounds = array<i64: 2, 1, 64>}, {pipeline_mode = #tpu.pipeline_mode<synchronous>, transform_indices = @transform_8, window_bounds = array<i64: 2, 64, 32>}, {pipeline_mode = #tpu.pipeline_mode<synchronous>, transform_indices = @transform_9, window_bounds = array<i64: 2, 6, 32>}, {pipeline_mode = #tpu.pipeline_mode<synchronous>, transform_indices = @transform_10, window_bounds = array<i64: 32, 256>}, {pipeline_mode = #tpu.pipeline_mode<synchronous>, transform_indices = @transform_11, window_bounds = array<i64: 1, 256>}, {pipeline_mode = #tpu.pipeline_mode<synchronous>, transform_indices = @transform_12, window_bounds = array<i64: 256, 128>}, {pipeline_mode = #tpu.pipeline_mode<synchronous>, transform_indices = @transform_13, window_bounds = array<i64: 1, 128>}, {transform_indices = @transform_14, window_bounds = array<i64: 1, 1, 128>}]} {
    %c0 = arith.constant 0 : index
    %c0_0 = arith.constant 0 : index
    %0 = vector.load %arg1[%c0, %c0_0] : memref<8x32xf32, #tpu.memory_space<vmem>>, vector<8x32xf32>
    %c0_1 = arith.constant 0 : index
    %c0_2 = arith.constant 0 : index
    %1 = vector.load %arg3[%c0_1, %c0_2] : memref<2x32xf32, #tpu.memory_space<vmem>>, vector<1x32xf32>
    %c1 = arith.constant 1 : index
    %c0_3 = arith.constant 0 : index
    %2 = vector.load %arg3[%c1, %c0_3] : memref<2x32xf32, #tpu.memory_space<vmem>>, vector<1x32xf32>
    %cst = arith.constant dense<0.000000e+00> : vector<8xf32>
    %3 = vector.multi_reduction <add>, %0, %cst [1] : vector<8x32xf32> to vector<8xf32>
    %4 = vector.shape_cast %3 : vector<8xf32> to vector<8x1xf32>
    %cst_4 = arith.constant 3.200000e+01 : f32
    %5 = vector.broadcast %cst_4 : f32 to vector<8x1xf32>
    %6 = arith.divf %4, %5 : vector<8x1xf32>
    %7 = vector.broadcast %6 : vector<8x1xf32> to vector<8x32xf32>
    %8 = arith.subf %0, %7 : vector<8x32xf32>
    %9 = arith.mulf %8, %8 : vector<8x32xf32>
    %cst_5 = arith.constant dense<0.000000e+00> : vector<8xf32>
    %10 = vector.multi_reduction <add>, %9, %cst_5 [1] : vector<8x32xf32> to vector<8xf32>
    %11 = vector.shape_cast %10 : vector<8xf32> to vector<8x1xf32>
    %cst_6 = arith.constant 3.200000e+01 : f32
    %12 = vector.broadcast %cst_6 : f32 to vector<8x1xf32>
    %13 = arith.divf %11, %12 : vector<8x1xf32>
    %cst_7 = arith.constant 9.99999974E-6 : f32
    %14 = vector.broadcast %cst_7 : f32 to vector<8x1xf32>
    %15 = arith.addf %13, %14 : vector<8x1xf32>
    %16 = math.rsqrt %15 : vector<8x1xf32>
    %17 = vector.broadcast %16 : vector<8x1xf32> to vector<8x32xf32>
    %18 = arith.mulf %8, %17 : vector<8x32xf32>
    %19 = vector.broadcast %1 : vector<1x32xf32> to vector<8x32xf32>
    %20 = arith.mulf %18, %19 : vector<8x32xf32>
    %21 = vector.broadcast %2 : vector<1x32xf32> to vector<8x32xf32>
    %22 = arith.addf %20, %21 : vector<8x32xf32>
    %c0_8 = arith.constant 0 : index
    %c0_9 = arith.constant 0 : index
    %c0_10 = arith.constant 0 : index
    %23 = vector.load %arg2[%c0_8, %c0_9, %c0_10] : memref<1x1x8xf32, #tpu.memory_space<vmem>>, vector<1x1x8xf32>
    %24 = vector.shape_cast %23 : vector<1x1x8xf32> to vector<1x1x8xf32>
    %25 = vector.broadcast %24 : vector<1x1x8xf32> to vector<4x8x8xf32>
    %26 = arith.truncf %22 : vector<8x32xf32> to vector<8x32xbf16>
    %27 = vector.shape_cast %26 : vector<8x32xbf16> to vector<1x8x32xbf16>
    %28 = vector.shape_cast %27 : vector<1x8x32xbf16> to vector<1x8x32xbf16>
    %29 = vector.broadcast %28 : vector<1x8x32xbf16> to vector<4x8x32xbf16>
    %c0_11 = arith.constant 0 : index
    %c0_12 = arith.constant 0 : index
    %c0_13 = arith.constant 0 : index
    %c0_14 = arith.constant 0 : index
    %30 = vector.load %arg4[%c0_11, %c0_12, %c0_13, %c0_14] : memref<6x4x32x8xbf16, #tpu.memory_space<vmem>>, vector<1x4x32x8xbf16>
    %31 = vector.shape_cast %30 : vector<1x4x32x8xbf16> to vector<4x32x8xbf16>
    "tpu.trace_start"() <{level = 10 : i32, message = "nsh,nhd->nsd"}> : () -> ()
    %cst_15 = arith.constant dense<0.000000e+00> : vector<4x8x8xf32>
    %32 = tpu.matmul %29, %31, %cst_15 {dimension_numbers = #tpu.dot_dimension_numbers<[2], [1], [1], [2], [0, 0, 0, 1, 1, 2], [0], [0]>} : vector<4x8x32xbf16>, vector<4x32x8xbf16>, vector<4x8x8xf32> -> vector<4x8x8xf32>
    "tpu.trace_stop"() : () -> ()
    %c0_16 = arith.constant 0 : index
    %c0_17 = arith.constant 0 : index
    %c0_18 = arith.constant 0 : index
    %c0_19 = arith.constant 0 : index
    %33 = vector.load %arg5[%c0_16, %c0_17, %c0_18, %c0_19] : memref<6x4x1x8xf32, #tpu.memory_space<vmem>>, vector<1x4x1x8xf32>
    %34 = vector.shape_cast %33 : vector<1x4x1x8xf32> to vector<4x1x8xf32>
    %35 = vector.broadcast %34 : vector<4x1x8xf32> to vector<4x8x8xf32>
    %36 = arith.addf %32, %35 : vector<4x8x8xf32>
    %c1_20 = arith.constant 1 : index
    %c0_21 = arith.constant 0 : index
    %c0_22 = arith.constant 0 : index
    %c0_23 = arith.constant 0 : index
    %37 = vector.load %arg4[%c1_20, %c0_21, %c0_22, %c0_23] : memref<6x4x32x8xbf16, #tpu.memory_space<vmem>>, vector<1x4x32x8xbf16>
    %38 = vector.shape_cast %37 : vector<1x4x32x8xbf16> to vector<4x32x8xbf16>
    "tpu.trace_start"() <{level = 10 : i32, message = "nsh,nhd->nsd"}> : () -> ()
    %cst_24 = arith.constant dense<0.000000e+00> : vector<4x8x8xf32>
    %39 = tpu.matmul %29, %38, %cst_24 {dimension_numbers = #tpu.dot_dimension_numbers<[2], [1], [1], [2], [0, 0, 0, 1, 1, 2], [0], [0]>} : vector<4x8x32xbf16>, vector<4x32x8xbf16>, vector<4x8x8xf32> -> vector<4x8x8xf32>
    "tpu.trace_stop"() : () -> ()
    %c1_25 = arith.constant 1 : index
    %c0_26 = arith.constant 0 : index
    %c0_27 = arith.constant 0 : index
    %c0_28 = arith.constant 0 : index
    %40 = vector.load %arg5[%c1_25, %c0_26, %c0_27, %c0_28] : memref<6x4x1x8xf32, #tpu.memory_space<vmem>>, vector<1x4x1x8xf32>
    %41 = vector.shape_cast %40 : vector<1x4x1x8xf32> to vector<4x1x8xf32>
    %42 = vector.broadcast %41 : vector<4x1x8xf32> to vector<4x8x8xf32>
    %43 = arith.addf %39, %42 : vector<4x8x8xf32>
    %c2 = arith.constant 2 : index
    %c0_29 = arith.constant 0 : index
    %c0_30 = arith.constant 0 : index
    %c0_31 = arith.constant 0 : index
    %44 = vector.load %arg4[%c2, %c0_29, %c0_30, %c0_31] : memref<6x4x32x8xbf16, #tpu.memory_space<vmem>>, vector<1x4x32x8xbf16>
    %45 = vector.shape_cast %44 : vector<1x4x32x8xbf16> to vector<4x32x8xbf16>
    "tpu.trace_start"() <{level = 10 : i32, message = "nsh,nhd->nsd"}> : () -> ()
    %cst_32 = arith.constant dense<0.000000e+00> : vector<4x8x8xf32>
    %46 = tpu.matmul %29, %45, %cst_32 {dimension_numbers = #tpu.dot_dimension_numbers<[2], [1], [1], [2], [0, 0, 0, 1, 1, 2], [0], [0]>} : vector<4x8x32xbf16>, vector<4x32x8xbf16>, vector<4x8x8xf32> -> vector<4x8x8xf32>
    "tpu.trace_stop"() : () -> ()
    %c2_33 = arith.constant 2 : index
    %c0_34 = arith.constant 0 : index
    %c0_35 = arith.constant 0 : index
    %c0_36 = arith.constant 0 : index
    %47 = vector.load %arg5[%c2_33, %c0_34, %c0_35, %c0_36] : memref<6x4x1x8xf32, #tpu.memory_space<vmem>>, vector<1x4x1x8xf32>
    %48 = vector.shape_cast %47 : vector<1x4x1x8xf32> to vector<4x1x8xf32>
    %49 = vector.broadcast %48 : vector<4x1x8xf32> to vector<4x8x8xf32>
    %50 = arith.addf %46, %49 : vector<4x8x8xf32>
    %51 = arith.truncf %36 : vector<4x8x8xf32> to vector<4x8x8xbf16>
    %52 = arith.truncf %43 : vector<4x8x8xf32> to vector<4x8x8xbf16>
    "tpu.trace_start"() <{level = 10 : i32, message = "nsd,ntd->nst"}> : () -> ()
    %cst_37 = arith.constant dense<0.000000e+00> : vector<4x8x8xf32>
    %53 = tpu.matmul %51, %52, %cst_37 {dimension_numbers = #tpu.dot_dimension_numbers<[2], [2], [1], [1], [0, 0, 0, 1, 1, 1], [0], [0]>} : vector<4x8x8xbf16>, vector<4x8x8xbf16>, vector<4x8x8xf32> -> vector<4x8x8xf32>
    "tpu.trace_stop"() : () -> ()
    %54 = arith.addf %53, %25 : vector<4x8x8xf32>
    %cst_38 = arith.constant dense<0xFF800000> : vector<4x8xf32>
    %55 = vector.multi_reduction <maximumf>, %54, %cst_38 [2] : vector<4x8x8xf32> to vector<4x8xf32>
    %56 = vector.shape_cast %55 : vector<4x8xf32> to vector<4x8x1xf32>
    %57 = vector.broadcast %56 : vector<4x8x1xf32> to vector<4x8x8xf32>
    %58 = arith.subf %54, %57 : vector<4x8x8xf32>
    %59 = math.exp %58 : vector<4x8x8xf32>
    %cst_39 = arith.constant dense<0.000000e+00> : vector<4x8xf32>
    %60 = vector.multi_reduction <add>, %59, %cst_39 [2] : vector<4x8x8xf32> to vector<4x8xf32>
    %61 = vector.shape_cast %60 : vector<4x8xf32> to vector<4x8x1xf32>
    %62 = arith.truncf %59 : vector<4x8x8xf32> to vector<4x8x8xbf16>
    %63 = arith.truncf %50 : vector<4x8x8xf32> to vector<4x8x8xbf16>
    "tpu.trace_start"() <{level = 10 : i32, message = "nst,ntd->nsd"}> : () -> ()
    %cst_40 = arith.constant dense<0.000000e+00> : vector<4x8x8xf32>
    %64 = tpu.matmul %62, %63, %cst_40 {dimension_numbers = #tpu.dot_dimension_numbers<[2], [1], [1], [2], [0, 0, 0, 1, 1, 2], [0], [0]>} : vector<4x8x8xbf16>, vector<4x8x8xbf16>, vector<4x8x8xf32> -> vector<4x8x8xf32>
    "tpu.trace_stop"() : () -> ()
    %65 = tpu.reciprocal %61 {approx = true} : vector<4x8x1xf32> -> vector<4x8x1xf32>
    %66 = vector.broadcast %65 : vector<4x8x1xf32> to vector<4x8x8xf32>
    %67 = arith.mulf %64, %66 : vector<4x8x8xf32>
    %68 = arith.truncf %67 : vector<4x8x8xf32> to vector<4x8x8xbf16>
    %c0_41 = arith.constant 0 : index
    %c0_42 = arith.constant 0 : index
    %c0_43 = arith.constant 0 : index
    %c0_44 = arith.constant 0 : index
    %69 = vector.load %arg6[%c0_41, %c0_42, %c0_43, %c0_44] : memref<2x4x8x32xbf16, #tpu.memory_space<vmem>>, vector<1x4x8x32xbf16>
    %70 = vector.shape_cast %69 : vector<1x4x8x32xbf16> to vector<4x8x32xbf16>
    "tpu.trace_start"() <{level = 10 : i32, message = "nsd,ndh->nsh"}> : () -> ()
    %cst_45 = arith.constant dense<0.000000e+00> : vector<4x8x32xf32>
    %71 = tpu.matmul %68, %70, %cst_45 {dimension_numbers = #tpu.dot_dimension_numbers<[2], [1], [1], [2], [0, 0, 0, 1, 1, 2], [0], [0]>} : vector<4x8x8xbf16>, vector<4x8x32xbf16>, vector<4x8x32xf32> -> vector<4x8x32xf32>
    "tpu.trace_stop"() : () -> ()
    %cst_46 = arith.constant dense<0.000000e+00> : vector<8x32xf32>
    %72 = vector.multi_reduction <add>, %71, %cst_46 [0] : vector<4x8x32xf32> to vector<8x32xf32>
    %c0_47 = arith.constant 0 : index
    %c0_48 = arith.constant 0 : index
    %c0_49 = arith.constant 0 : index
    %73 = vector.load %arg10[%c0_47, %c0_48, %c0_49] : memref<2x6x32xf32, #tpu.memory_space<vmem>>, vector<1x6x32xf32>
    %74 = vector.shape_cast %73 : vector<1x6x32xf32> to vector<6x32xf32>
    %75 = arith.addf %22, %72 : vector<8x32xf32>
    %76 = vector.extract_strided_slice %74 {offsets = [0, 0], sizes = [1, 32], strides = [1, 1]} : vector<6x32xf32> to vector<1x32xf32>
    %77 = vector.broadcast %76 : vector<1x32xf32> to vector<8x32xf32>
    %78 = arith.addf %75, %77 : vector<8x32xf32>
    %79 = vector.extract_strided_slice %74 {offsets = [1, 0], sizes = [1, 32], strides = [1, 1]} : vector<6x32xf32> to vector<1x32xf32>
    %80 = vector.extract_strided_slice %74 {offsets = [2, 0], sizes = [1, 32], strides = [1, 1]} : vector<6x32xf32> to vector<1x32xf32>
    %cst_50 = arith.constant dense<0.000000e+00> : vector<8xf32>
    %81 = vector.multi_reduction <add>, %78, %cst_50 [1] : vector<8x32xf32> to vector<8xf32>
    %82 = vector.shape_cast %81 : vector<8xf32> to vector<8x1xf32>
    %cst_51 = arith.constant 3.200000e+01 : f32
    %83 = vector.broadcast %cst_51 : f32 to vector<8x1xf32>
    %84 = arith.divf %82, %83 : vector<8x1xf32>
    %85 = vector.broadcast %84 : vector<8x1xf32> to vector<8x32xf32>
    %86 = arith.subf %78, %85 : vector<8x32xf32>
    %87 = arith.mulf %86, %86 : vector<8x32xf32>
    %cst_52 = arith.constant dense<0.000000e+00> : vector<8xf32>
    %88 = vector.multi_reduction <add>, %87, %cst_52 [1] : vector<8x32xf32> to vector<8xf32>
    %89 = vector.shape_cast %88 : vector<8xf32> to vector<8x1xf32>
    %cst_53 = arith.constant 3.200000e+01 : f32
    %90 = vector.broadcast %cst_53 : f32 to vector<8x1xf32>
    %91 = arith.divf %89, %90 : vector<8x1xf32>
    %cst_54 = arith.constant 9.99999974E-6 : f32
    %92 = vector.broadcast %cst_54 : f32 to vector<8x1xf32>
    %93 = arith.addf %91, %92 : vector<8x1xf32>
    %94 = math.rsqrt %93 : vector<8x1xf32>
    %95 = vector.broadcast %94 : vector<8x1xf32> to vector<8x32xf32>
    %96 = arith.mulf %86, %95 : vector<8x32xf32>
    %97 = vector.broadcast %79 : vector<1x32xf32> to vector<8x32xf32>
    %98 = arith.mulf %96, %97 : vector<8x32xf32>
    %99 = vector.broadcast %80 : vector<1x32xf32> to vector<8x32xf32>
    %100 = arith.addf %98, %99 : vector<8x32xf32>
    %101 = arith.truncf %100 : vector<8x32xf32> to vector<8x32xbf16>
    %c0_55 = arith.constant 0 : index
    %c0_56 = arith.constant 0 : index
    %c0_57 = arith.constant 0 : index
    %102 = vector.load %arg7[%c0_55, %c0_56, %c0_57] : memref<2x32x64xbf16, #tpu.memory_space<vmem>>, vector<1x32x64xbf16>
    %103 = vector.shape_cast %102 : vector<1x32x64xbf16> to vector<32x64xbf16>
    %cst_58 = arith.constant dense<0.000000e+00> : vector<8x64xf32>
    %104 = tpu.matmul %101, %103, %cst_58 {dimension_numbers = #tpu.dot_dimension_numbers<[1], [0], [0], [1], [0, 0, 1, 1], [], []>} : vector<8x32xbf16>, vector<32x64xbf16>, vector<8x64xf32> -> vector<8x64xf32>
    %c0_59 = arith.constant 0 : index
    %c0_60 = arith.constant 0 : index
    %c0_61 = arith.constant 0 : index
    %105 = vector.load %arg8[%c0_59, %c0_60, %c0_61] : memref<2x1x64xf32, #tpu.memory_space<vmem>>, vector<1x1x64xf32>
    %106 = vector.shape_cast %105 : vector<1x1x64xf32> to vector<1x64xf32>
    %107 = vector.broadcast %106 : vector<1x64xf32> to vector<8x64xf32>
    %108 = arith.addf %104, %107 : vector<8x64xf32>
    %cst_62 = arith.constant 5.000000e-01 : f32
    %109 = vector.broadcast %cst_62 : f32 to vector<8x64xf32>
    %110 = arith.mulf %109, %108 : vector<8x64xf32>
    %cst_63 = arith.constant 4.471500e-02 : f32
    %111 = vector.broadcast %cst_63 : f32 to vector<8x64xf32>
    %112 = arith.mulf %111, %108 : vector<8x64xf32>
    %113 = arith.mulf %112, %108 : vector<8x64xf32>
    %114 = arith.mulf %113, %108 : vector<8x64xf32>
    %115 = arith.addf %108, %114 : vector<8x64xf32>
    %cst_64 = arith.constant 0.797884583 : f32
    %116 = vector.broadcast %cst_64 : f32 to vector<8x64xf32>
    %117 = arith.mulf %116, %115 : vector<8x64xf32>
    %118 = math.tanh %117 : vector<8x64xf32>
    %cst_65 = arith.constant 1.000000e+00 : f32
    %119 = vector.broadcast %cst_65 : f32 to vector<8x64xf32>
    %120 = arith.addf %119, %118 : vector<8x64xf32>
    %121 = arith.mulf %110, %120 : vector<8x64xf32>
    %122 = arith.truncf %121 : vector<8x64xf32> to vector<8x64xbf16>
    %c0_66 = arith.constant 0 : index
    %c0_67 = arith.constant 0 : index
    %c0_68 = arith.constant 0 : index
    %123 = vector.load %arg9[%c0_66, %c0_67, %c0_68] : memref<2x64x32xbf16, #tpu.memory_space<vmem>>, vector<1x64x32xbf16>
    %124 = vector.shape_cast %123 : vector<1x64x32xbf16> to vector<64x32xbf16>
    %cst_69 = arith.constant dense<0.000000e+00> : vector<8x32xf32>
    %125 = tpu.matmul %122, %124, %cst_69 {dimension_numbers = #tpu.dot_dimension_numbers<[1], [0], [0], [1], [0, 0, 1, 1], [], []>} : vector<8x64xbf16>, vector<64x32xbf16>, vector<8x32xf32> -> vector<8x32xf32>
    %126 = vector.extract_strided_slice %74 {offsets = [3, 0], sizes = [1, 32], strides = [1, 1]} : vector<6x32xf32> to vector<1x32xf32>
    %127 = vector.broadcast %126 : vector<1x32xf32> to vector<8x32xf32>
    %128 = arith.addf %125, %127 : vector<8x32xf32>
    %129 = arith.addf %100, %128 : vector<8x32xf32>
    %130 = vector.extract_strided_slice %74 {offsets = [4, 0], sizes = [1, 32], strides = [1, 1]} : vector<6x32xf32> to vector<1x32xf32>
    %131 = vector.extract_strided_slice %74 {offsets = [5, 0], sizes = [1, 32], strides = [1, 1]} : vector<6x32xf32> to vector<1x32xf32>
    %cst_70 = arith.constant dense<0.000000e+00> : vector<8xf32>
    %132 = vector.multi_reduction <add>, %129, %cst_70 [1] : vector<8x32xf32> to vector<8xf32>
    %133 = vector.shape_cast %132 : vector<8xf32> to vector<8x1xf32>
    %cst_71 = arith.constant 3.200000e+01 : f32
    %134 = vector.broadcast %cst_71 : f32 to vector<8x1xf32>
    %135 = arith.divf %133, %134 : vector<8x1xf32>
    %136 = vector.broadcast %135 : vector<8x1xf32> to vector<8x32xf32>
    %137 = arith.subf %129, %136 : vector<8x32xf32>
    %138 = arith.mulf %137, %137 : vector<8x32xf32>
    %cst_72 = arith.constant dense<0.000000e+00> : vector<8xf32>
    %139 = vector.multi_reduction <add>, %138, %cst_72 [1] : vector<8x32xf32> to vector<8xf32>
    %140 = vector.shape_cast %139 : vector<8xf32> to vector<8x1xf32>
    %cst_73 = arith.constant 3.200000e+01 : f32
    %141 = vector.broadcast %cst_73 : f32 to vector<8x1xf32>
    %142 = arith.divf %140, %141 : vector<8x1xf32>
    %cst_74 = arith.constant 9.99999974E-6 : f32
    %143 = vector.broadcast %cst_74 : f32 to vector<8x1xf32>
    %144 = arith.addf %142, %143 : vector<8x1xf32>
    %145 = math.rsqrt %144 : vector<8x1xf32>
    %146 = vector.broadcast %145 : vector<8x1xf32> to vector<8x32xf32>
    %147 = arith.mulf %137, %146 : vector<8x32xf32>
    %148 = vector.broadcast %130 : vector<1x32xf32> to vector<8x32xf32>
    %149 = arith.mulf %147, %148 : vector<8x32xf32>
    %150 = vector.broadcast %131 : vector<1x32xf32> to vector<8x32xf32>
    %151 = arith.addf %149, %150 : vector<8x32xf32>
    %152 = arith.truncf %151 : vector<8x32xf32> to vector<8x32xbf16>
    %153 = vector.shape_cast %152 : vector<8x32xbf16> to vector<1x8x32xbf16>
    %154 = vector.shape_cast %153 : vector<1x8x32xbf16> to vector<1x8x32xbf16>
    %155 = vector.broadcast %154 : vector<1x8x32xbf16> to vector<4x8x32xbf16>
    %c3 = arith.constant 3 : index
    %c0_75 = arith.constant 0 : index
    %c0_76 = arith.constant 0 : index
    %c0_77 = arith.constant 0 : index
    %156 = vector.load %arg4[%c3, %c0_75, %c0_76, %c0_77] : memref<6x4x32x8xbf16, #tpu.memory_space<vmem>>, vector<1x4x32x8xbf16>
    %157 = vector.shape_cast %156 : vector<1x4x32x8xbf16> to vector<4x32x8xbf16>
    "tpu.trace_start"() <{level = 10 : i32, message = "nsh,nhd->nsd"}> : () -> ()
    %cst_78 = arith.constant dense<0.000000e+00> : vector<4x8x8xf32>
    %158 = tpu.matmul %155, %157, %cst_78 {dimension_numbers = #tpu.dot_dimension_numbers<[2], [1], [1], [2], [0, 0, 0, 1, 1, 2], [0], [0]>} : vector<4x8x32xbf16>, vector<4x32x8xbf16>, vector<4x8x8xf32> -> vector<4x8x8xf32>
    "tpu.trace_stop"() : () -> ()
    %c3_79 = arith.constant 3 : index
    %c0_80 = arith.constant 0 : index
    %c0_81 = arith.constant 0 : index
    %c0_82 = arith.constant 0 : index
    %159 = vector.load %arg5[%c3_79, %c0_80, %c0_81, %c0_82] : memref<6x4x1x8xf32, #tpu.memory_space<vmem>>, vector<1x4x1x8xf32>
    %160 = vector.shape_cast %159 : vector<1x4x1x8xf32> to vector<4x1x8xf32>
    %161 = vector.broadcast %160 : vector<4x1x8xf32> to vector<4x8x8xf32>
    %162 = arith.addf %158, %161 : vector<4x8x8xf32>
    %c4 = arith.constant 4 : index
    %c0_83 = arith.constant 0 : index
    %c0_84 = arith.constant 0 : index
    %c0_85 = arith.constant 0 : index
    %163 = vector.load %arg4[%c4, %c0_83, %c0_84, %c0_85] : memref<6x4x32x8xbf16, #tpu.memory_space<vmem>>, vector<1x4x32x8xbf16>
    %164 = vector.shape_cast %163 : vector<1x4x32x8xbf16> to vector<4x32x8xbf16>
    "tpu.trace_start"() <{level = 10 : i32, message = "nsh,nhd->nsd"}> : () -> ()
    %cst_86 = arith.constant dense<0.000000e+00> : vector<4x8x8xf32>
    %165 = tpu.matmul %155, %164, %cst_86 {dimension_numbers = #tpu.dot_dimension_numbers<[2], [1], [1], [2], [0, 0, 0, 1, 1, 2], [0], [0]>} : vector<4x8x32xbf16>, vector<4x32x8xbf16>, vector<4x8x8xf32> -> vector<4x8x8xf32>
    "tpu.trace_stop"() : () -> ()
    %c4_87 = arith.constant 4 : index
    %c0_88 = arith.constant 0 : index
    %c0_89 = arith.constant 0 : index
    %c0_90 = arith.constant 0 : index
    %166 = vector.load %arg5[%c4_87, %c0_88, %c0_89, %c0_90] : memref<6x4x1x8xf32, #tpu.memory_space<vmem>>, vector<1x4x1x8xf32>
    %167 = vector.shape_cast %166 : vector<1x4x1x8xf32> to vector<4x1x8xf32>
    %168 = vector.broadcast %167 : vector<4x1x8xf32> to vector<4x8x8xf32>
    %169 = arith.addf %165, %168 : vector<4x8x8xf32>
    %c5 = arith.constant 5 : index
    %c0_91 = arith.constant 0 : index
    %c0_92 = arith.constant 0 : index
    %c0_93 = arith.constant 0 : index
    %170 = vector.load %arg4[%c5, %c0_91, %c0_92, %c0_93] : memref<6x4x32x8xbf16, #tpu.memory_space<vmem>>, vector<1x4x32x8xbf16>
    %171 = vector.shape_cast %170 : vector<1x4x32x8xbf16> to vector<4x32x8xbf16>
    "tpu.trace_start"() <{level = 10 : i32, message = "nsh,nhd->nsd"}> : () -> ()
    %cst_94 = arith.constant dense<0.000000e+00> : vector<4x8x8xf32>
    %172 = tpu.matmul %155, %171, %cst_94 {dimension_numbers = #tpu.dot_dimension_numbers<[2], [1], [1], [2], [0, 0, 0, 1, 1, 2], [0], [0]>} : vector<4x8x32xbf16>, vector<4x32x8xbf16>, vector<4x8x8xf32> -> vector<4x8x8xf32>
    "tpu.trace_stop"() : () -> ()
    %c5_95 = arith.constant 5 : index
    %c0_96 = arith.constant 0 : index
    %c0_97 = arith.constant 0 : index
    %c0_98 = arith.constant 0 : index
    %173 = vector.load %arg5[%c5_95, %c0_96, %c0_97, %c0_98] : memref<6x4x1x8xf32, #tpu.memory_space<vmem>>, vector<1x4x1x8xf32>
    %174 = vector.shape_cast %173 : vector<1x4x1x8xf32> to vector<4x1x8xf32>
    %175 = vector.broadcast %174 : vector<4x1x8xf32> to vector<4x8x8xf32>
    %176 = arith.addf %172, %175 : vector<4x8x8xf32>
    %177 = arith.truncf %162 : vector<4x8x8xf32> to vector<4x8x8xbf16>
    %178 = arith.truncf %169 : vector<4x8x8xf32> to vector<4x8x8xbf16>
    "tpu.trace_start"() <{level = 10 : i32, message = "nsd,ntd->nst"}> : () -> ()
    %cst_99 = arith.constant dense<0.000000e+00> : vector<4x8x8xf32>
    %179 = tpu.matmul %177, %178, %cst_99 {dimension_numbers = #tpu.dot_dimension_numbers<[2], [2], [1], [1], [0, 0, 0, 1, 1, 1], [0], [0]>} : vector<4x8x8xbf16>, vector<4x8x8xbf16>, vector<4x8x8xf32> -> vector<4x8x8xf32>
    "tpu.trace_stop"() : () -> ()
    %180 = arith.addf %179, %25 : vector<4x8x8xf32>
    %cst_100 = arith.constant dense<0xFF800000> : vector<4x8xf32>
    %181 = vector.multi_reduction <maximumf>, %180, %cst_100 [2] : vector<4x8x8xf32> to vector<4x8xf32>
    %182 = vector.shape_cast %181 : vector<4x8xf32> to vector<4x8x1xf32>
    %183 = vector.broadcast %182 : vector<4x8x1xf32> to vector<4x8x8xf32>
    %184 = arith.subf %180, %183 : vector<4x8x8xf32>
    %185 = math.exp %184 : vector<4x8x8xf32>
    %cst_101 = arith.constant dense<0.000000e+00> : vector<4x8xf32>
    %186 = vector.multi_reduction <add>, %185, %cst_101 [2] : vector<4x8x8xf32> to vector<4x8xf32>
    %187 = vector.shape_cast %186 : vector<4x8xf32> to vector<4x8x1xf32>
    %188 = arith.truncf %185 : vector<4x8x8xf32> to vector<4x8x8xbf16>
    %189 = arith.truncf %176 : vector<4x8x8xf32> to vector<4x8x8xbf16>
    "tpu.trace_start"() <{level = 10 : i32, message = "nst,ntd->nsd"}> : () -> ()
    %cst_102 = arith.constant dense<0.000000e+00> : vector<4x8x8xf32>
    %190 = tpu.matmul %188, %189, %cst_102 {dimension_numbers = #tpu.dot_dimension_numbers<[2], [1], [1], [2], [0, 0, 0, 1, 1, 2], [0], [0]>} : vector<4x8x8xbf16>, vector<4x8x8xbf16>, vector<4x8x8xf32> -> vector<4x8x8xf32>
    "tpu.trace_stop"() : () -> ()
    %191 = tpu.reciprocal %187 {approx = true} : vector<4x8x1xf32> -> vector<4x8x1xf32>
    %192 = vector.broadcast %191 : vector<4x8x1xf32> to vector<4x8x8xf32>
    %193 = arith.mulf %190, %192 : vector<4x8x8xf32>
    %194 = arith.truncf %193 : vector<4x8x8xf32> to vector<4x8x8xbf16>
    %c1_103 = arith.constant 1 : index
    %c0_104 = arith.constant 0 : index
    %c0_105 = arith.constant 0 : index
    %c0_106 = arith.constant 0 : index
    %195 = vector.load %arg6[%c1_103, %c0_104, %c0_105, %c0_106] : memref<2x4x8x32xbf16, #tpu.memory_space<vmem>>, vector<1x4x8x32xbf16>
    %196 = vector.shape_cast %195 : vector<1x4x8x32xbf16> to vector<4x8x32xbf16>
    "tpu.trace_start"() <{level = 10 : i32, message = "nsd,ndh->nsh"}> : () -> ()
    %cst_107 = arith.constant dense<0.000000e+00> : vector<4x8x32xf32>
    %197 = tpu.matmul %194, %196, %cst_107 {dimension_numbers = #tpu.dot_dimension_numbers<[2], [1], [1], [2], [0, 0, 0, 1, 1, 2], [0], [0]>} : vector<4x8x8xbf16>, vector<4x8x32xbf16>, vector<4x8x32xf32> -> vector<4x8x32xf32>
    "tpu.trace_stop"() : () -> ()
    %cst_108 = arith.constant dense<0.000000e+00> : vector<8x32xf32>
    %198 = vector.multi_reduction <add>, %197, %cst_108 [0] : vector<4x8x32xf32> to vector<8x32xf32>
    %c1_109 = arith.constant 1 : index
    %c0_110 = arith.constant 0 : index
    %c0_111 = arith.constant 0 : index
    %199 = vector.load %arg10[%c1_109, %c0_110, %c0_111] : memref<2x6x32xf32, #tpu.memory_space<vmem>>, vector<1x6x32xf32>
    %200 = vector.shape_cast %199 : vector<1x6x32xf32> to vector<6x32xf32>
    %201 = arith.addf %151, %198 : vector<8x32xf32>
    %202 = vector.extract_strided_slice %200 {offsets = [0, 0], sizes = [1, 32], strides = [1, 1]} : vector<6x32xf32> to vector<1x32xf32>
    %203 = vector.broadcast %202 : vector<1x32xf32> to vector<8x32xf32>
    %204 = arith.addf %201, %203 : vector<8x32xf32>
    %205 = vector.extract_strided_slice %200 {offsets = [1, 0], sizes = [1, 32], strides = [1, 1]} : vector<6x32xf32> to vector<1x32xf32>
    %206 = vector.extract_strided_slice %200 {offsets = [2, 0], sizes = [1, 32], strides = [1, 1]} : vector<6x32xf32> to vector<1x32xf32>
    %cst_112 = arith.constant dense<0.000000e+00> : vector<8xf32>
    %207 = vector.multi_reduction <add>, %204, %cst_112 [1] : vector<8x32xf32> to vector<8xf32>
    %208 = vector.shape_cast %207 : vector<8xf32> to vector<8x1xf32>
    %cst_113 = arith.constant 3.200000e+01 : f32
    %209 = vector.broadcast %cst_113 : f32 to vector<8x1xf32>
    %210 = arith.divf %208, %209 : vector<8x1xf32>
    %211 = vector.broadcast %210 : vector<8x1xf32> to vector<8x32xf32>
    %212 = arith.subf %204, %211 : vector<8x32xf32>
    %213 = arith.mulf %212, %212 : vector<8x32xf32>
    %cst_114 = arith.constant dense<0.000000e+00> : vector<8xf32>
    %214 = vector.multi_reduction <add>, %213, %cst_114 [1] : vector<8x32xf32> to vector<8xf32>
    %215 = vector.shape_cast %214 : vector<8xf32> to vector<8x1xf32>
    %cst_115 = arith.constant 3.200000e+01 : f32
    %216 = vector.broadcast %cst_115 : f32 to vector<8x1xf32>
    %217 = arith.divf %215, %216 : vector<8x1xf32>
    %cst_116 = arith.constant 9.99999974E-6 : f32
    %218 = vector.broadcast %cst_116 : f32 to vector<8x1xf32>
    %219 = arith.addf %217, %218 : vector<8x1xf32>
    %220 = math.rsqrt %219 : vector<8x1xf32>
    %221 = vector.broadcast %220 : vector<8x1xf32> to vector<8x32xf32>
    %222 = arith.mulf %212, %221 : vector<8x32xf32>
    %223 = vector.broadcast %205 : vector<1x32xf32> to vector<8x32xf32>
    %224 = arith.mulf %222, %223 : vector<8x32xf32>
    %225 = vector.broadcast %206 : vector<1x32xf32> to vector<8x32xf32>
    %226 = arith.addf %224, %225 : vector<8x32xf32>
    %227 = arith.truncf %226 : vector<8x32xf32> to vector<8x32xbf16>
    %c1_117 = arith.constant 1 : index
    %c0_118 = arith.constant 0 : index
    %c0_119 = arith.constant 0 : index
    %228 = vector.load %arg7[%c1_117, %c0_118, %c0_119] : memref<2x32x64xbf16, #tpu.memory_space<vmem>>, vector<1x32x64xbf16>
    %229 = vector.shape_cast %228 : vector<1x32x64xbf16> to vector<32x64xbf16>
    %cst_120 = arith.constant dense<0.000000e+00> : vector<8x64xf32>
    %230 = tpu.matmul %227, %229, %cst_120 {dimension_numbers = #tpu.dot_dimension_numbers<[1], [0], [0], [1], [0, 0, 1, 1], [], []>} : vector<8x32xbf16>, vector<32x64xbf16>, vector<8x64xf32> -> vector<8x64xf32>
    %c1_121 = arith.constant 1 : index
    %c0_122 = arith.constant 0 : index
    %c0_123 = arith.constant 0 : index
    %231 = vector.load %arg8[%c1_121, %c0_122, %c0_123] : memref<2x1x64xf32, #tpu.memory_space<vmem>>, vector<1x1x64xf32>
    %232 = vector.shape_cast %231 : vector<1x1x64xf32> to vector<1x64xf32>
    %233 = vector.broadcast %232 : vector<1x64xf32> to vector<8x64xf32>
    %234 = arith.addf %230, %233 : vector<8x64xf32>
    %cst_124 = arith.constant 5.000000e-01 : f32
    %235 = vector.broadcast %cst_124 : f32 to vector<8x64xf32>
    %236 = arith.mulf %235, %234 : vector<8x64xf32>
    %cst_125 = arith.constant 4.471500e-02 : f32
    %237 = vector.broadcast %cst_125 : f32 to vector<8x64xf32>
    %238 = arith.mulf %237, %234 : vector<8x64xf32>
    %239 = arith.mulf %238, %234 : vector<8x64xf32>
    %240 = arith.mulf %239, %234 : vector<8x64xf32>
    %241 = arith.addf %234, %240 : vector<8x64xf32>
    %cst_126 = arith.constant 0.797884583 : f32
    %242 = vector.broadcast %cst_126 : f32 to vector<8x64xf32>
    %243 = arith.mulf %242, %241 : vector<8x64xf32>
    %244 = math.tanh %243 : vector<8x64xf32>
    %cst_127 = arith.constant 1.000000e+00 : f32
    %245 = vector.broadcast %cst_127 : f32 to vector<8x64xf32>
    %246 = arith.addf %245, %244 : vector<8x64xf32>
    %247 = arith.mulf %236, %246 : vector<8x64xf32>
    %248 = arith.truncf %247 : vector<8x64xf32> to vector<8x64xbf16>
    %c1_128 = arith.constant 1 : index
    %c0_129 = arith.constant 0 : index
    %c0_130 = arith.constant 0 : index
    %249 = vector.load %arg9[%c1_128, %c0_129, %c0_130] : memref<2x64x32xbf16, #tpu.memory_space<vmem>>, vector<1x64x32xbf16>
    %250 = vector.shape_cast %249 : vector<1x64x32xbf16> to vector<64x32xbf16>
    %cst_131 = arith.constant dense<0.000000e+00> : vector<8x32xf32>
    %251 = tpu.matmul %248, %250, %cst_131 {dimension_numbers = #tpu.dot_dimension_numbers<[1], [0], [0], [1], [0, 0, 1, 1], [], []>} : vector<8x64xbf16>, vector<64x32xbf16>, vector<8x32xf32> -> vector<8x32xf32>
    %252 = vector.extract_strided_slice %200 {offsets = [3, 0], sizes = [1, 32], strides = [1, 1]} : vector<6x32xf32> to vector<1x32xf32>
    %253 = vector.broadcast %252 : vector<1x32xf32> to vector<8x32xf32>
    %254 = arith.addf %251, %253 : vector<8x32xf32>
    %255 = arith.addf %226, %254 : vector<8x32xf32>
    %256 = vector.extract_strided_slice %200 {offsets = [4, 0], sizes = [1, 32], strides = [1, 1]} : vector<6x32xf32> to vector<1x32xf32>
    %257 = vector.extract_strided_slice %200 {offsets = [5, 0], sizes = [1, 32], strides = [1, 1]} : vector<6x32xf32> to vector<1x32xf32>
    %cst_132 = arith.constant dense<0.000000e+00> : vector<8xf32>
    %258 = vector.multi_reduction <add>, %255, %cst_132 [1] : vector<8x32xf32> to vector<8xf32>
    %259 = vector.shape_cast %258 : vector<8xf32> to vector<8x1xf32>
    %cst_133 = arith.constant 3.200000e+01 : f32
    %260 = vector.broadcast %cst_133 : f32 to vector<8x1xf32>
    %261 = arith.divf %259, %260 : vector<8x1xf32>
    %262 = vector.broadcast %261 : vector<8x1xf32> to vector<8x32xf32>
    %263 = arith.subf %255, %262 : vector<8x32xf32>
    %264 = arith.mulf %263, %263 : vector<8x32xf32>
    %cst_134 = arith.constant dense<0.000000e+00> : vector<8xf32>
    %265 = vector.multi_reduction <add>, %264, %cst_134 [1] : vector<8x32xf32> to vector<8xf32>
    %266 = vector.shape_cast %265 : vector<8xf32> to vector<8x1xf32>
    %cst_135 = arith.constant 3.200000e+01 : f32
    %267 = vector.broadcast %cst_135 : f32 to vector<8x1xf32>
    %268 = arith.divf %266, %267 : vector<8x1xf32>
    %cst_136 = arith.constant 9.99999974E-6 : f32
    %269 = vector.broadcast %cst_136 : f32 to vector<8x1xf32>
    %270 = arith.addf %268, %269 : vector<8x1xf32>
    %271 = math.rsqrt %270 : vector<8x1xf32>
    %272 = vector.broadcast %271 : vector<8x1xf32> to vector<8x32xf32>
    %273 = arith.mulf %263, %272 : vector<8x32xf32>
    %274 = vector.broadcast %256 : vector<1x32xf32> to vector<8x32xf32>
    %275 = arith.mulf %273, %274 : vector<8x32xf32>
    %276 = vector.broadcast %257 : vector<1x32xf32> to vector<8x32xf32>
    %277 = arith.addf %275, %276 : vector<8x32xf32>
    %278 = vector.extract_strided_slice %277 {offsets = [0, 0], sizes = [1, 32], strides = [1, 1]} : vector<8x32xf32> to vector<1x32xf32>
    %279 = arith.truncf %278 : vector<1x32xf32> to vector<1x32xbf16>
    %c0_137 = arith.constant 0 : index
    %c0_138 = arith.constant 0 : index
    %280 = vector.load %arg11[%c0_137, %c0_138] : memref<32x256xbf16, #tpu.memory_space<vmem>>, vector<32x256xbf16>
    %cst_139 = arith.constant dense<0.000000e+00> : vector<1x256xf32>
    %281 = tpu.matmul %279, %280, %cst_139 {dimension_numbers = #tpu.dot_dimension_numbers<[1], [0], [0], [1], [0, 0, 1, 1], [], []>} : vector<1x32xbf16>, vector<32x256xbf16>, vector<1x256xf32> -> vector<1x256xf32>
    %c0_140 = arith.constant 0 : index
    %c0_141 = arith.constant 0 : index
    %282 = vector.load %arg12[%c0_140, %c0_141] : memref<1x256xf32, #tpu.memory_space<vmem>>, vector<1x256xf32>
    %283 = arith.addf %281, %282 : vector<1x256xf32>
    %cst_142 = arith.constant 0.000000e+00 : f32
    %284 = vector.broadcast %cst_142 : f32 to vector<1x256xf32>
    %285 = arith.maximumf %283, %284 : vector<1x256xf32>
    %286 = arith.truncf %285 : vector<1x256xf32> to vector<1x256xbf16>
    %c0_143 = arith.constant 0 : index
    %c0_144 = arith.constant 0 : index
    %287 = vector.load %arg13[%c0_143, %c0_144] : memref<256x128xbf16, #tpu.memory_space<vmem>>, vector<256x128xbf16>
    %cst_145 = arith.constant dense<0.000000e+00> : vector<1x128xf32>
    %288 = tpu.matmul %286, %287, %cst_145 {dimension_numbers = #tpu.dot_dimension_numbers<[1], [0], [0], [1], [0, 0, 1, 1], [], []>} : vector<1x256xbf16>, vector<256x128xbf16>, vector<1x128xf32> -> vector<1x128xf32>
    %c0_146 = arith.constant 0 : index
    %c0_147 = arith.constant 0 : index
    %289 = vector.load %arg14[%c0_146, %c0_147] : memref<1x128xf32, #tpu.memory_space<vmem>>, vector<1x128xf32>
    %290 = arith.addf %288, %289 : vector<1x128xf32>
    %cst_148 = arith.constant 0.000000e+00 : f32
    %291 = vector.broadcast %cst_148 : f32 to vector<1x128xf32>
    %292 = arith.subf %291, %290 : vector<1x128xf32>
    %293 = math.exp %292 : vector<1x128xf32>
    %cst_149 = arith.constant 1.000000e+00 : f32
    %294 = vector.broadcast %cst_149 : f32 to vector<1x128xf32>
    %295 = arith.addf %294, %293 : vector<1x128xf32>
    %cst_150 = arith.constant 1.000000e+00 : f32
    %296 = vector.broadcast %cst_150 : f32 to vector<1x128xf32>
    %297 = arith.divf %296, %295 : vector<1x128xf32>
    %298 = vector.shape_cast %297 : vector<1x128xf32> to vector<1x1x128xf32>
    %c0_151 = arith.constant 0 : index
    %c0_152 = arith.constant 0 : index
    %c0_153 = arith.constant 0 : index
    %299 = vector.load %arg15[%c0_151, %c0_152, %c0_153] : memref<1x1x128xf32, #tpu.memory_space<vmem>>, vector<1x1x128xf32>
    tpu.vector_store %arg15[%c0_151, %c0_152, %c0_153], %298 {strides = array<i32>} : memref<1x1x128xf32, #tpu.memory_space<vmem>>, vector<1x1x128xf32>,
    return
  }
  func.func @transform_0(%arg0: i32) -> (i32, i32) {
    %c0_i32 = arith.constant 0 : i32
    %c0_i32_0 = arith.constant 0 : i32
    return %arg0, %c0_i32 : i32, i32
  }
  func.func @transform_1(%arg0: i32) -> (i32, i32, i32) {
    %c0_i32 = arith.constant 0 : i32
    %c0_i32_0 = arith.constant 0 : i32
    %c0_i32_1 = arith.constant 0 : i32
    return %arg0, %c0_i32, %c0_i32_0 : i32, i32, i32
  }
  func.func @transform_2(%arg0: i32) -> (i32, i32) {
    %c0_i32 = arith.constant 0 : i32
    %c0_i32_0 = arith.constant 0 : i32
    %c0_i32_1 = arith.constant 0 : i32
    return %c0_i32, %c0_i32_0 : i32, i32
  }
  func.func @transform_3(%arg0: i32) -> (i32, i32, i32, i32) {
    %c0_i32 = arith.constant 0 : i32
    %c0_i32_0 = arith.constant 0 : i32
    %c0_i32_1 = arith.constant 0 : i32
    %c0_i32_2 = arith.constant 0 : i32
    %c0_i32_3 = arith.constant 0 : i32
    return %c0_i32, %c0_i32_0, %c0_i32_1, %c0_i32_2 : i32, i32, i32, i32
  }
  func.func @transform_4(%arg0: i32) -> (i32, i32, i32, i32) {
    %c0_i32 = arith.constant 0 : i32
    %c0_i32_0 = arith.constant 0 : i32
    %c0_i32_1 = arith.constant 0 : i32
    %c0_i32_2 = arith.constant 0 : i32
    %c0_i32_3 = arith.constant 0 : i32
    return %c0_i32, %c0_i32_0, %c0_i32_1, %c0_i32_2 : i32, i32, i32, i32
  }
  func.func @transform_5(%arg0: i32) -> (i32, i32, i32, i32) {
    %c0_i32 = arith.constant 0 : i32
    %c0_i32_0 = arith.constant 0 : i32
    %c0_i32_1 = arith.constant 0 : i32
    %c0_i32_2 = arith.constant 0 : i32
    %c0_i32_3 = arith.constant 0 : i32
    return %c0_i32, %c0_i32_0, %c0_i32_1, %c0_i32_2 : i32, i32, i32, i32
  }
  func.func @transform_6(%arg0: i32) -> (i32, i32, i32) {
    %c0_i32 = arith.constant 0 : i32
    %c0_i32_0 = arith.constant 0 : i32
    %c0_i32_1 = arith.constant 0 : i32
    %c0_i32_2 = arith.constant 0 : i32
    return %c0_i32, %c0_i32_0, %c0_i32_1 : i32, i32, i32
  }
  func.func @transform_7(%arg0: i32) -> (i32, i32, i32) {
    %c0_i32 = arith.constant 0 : i32
    %c0_i32_0 = arith.constant 0 : i32
    %c0_i32_1 = arith.constant 0 : i32
    %c0_i32_2 = arith.constant 0 : i32
    return %c0_i32, %c0_i32_0, %c0_i32_1 : i32, i32, i32
  }
  func.func @transform_8(%arg0: i32) -> (i32, i32, i32) {
    %c0_i32 = arith.constant 0 : i32
    %c0_i32_0 = arith.constant 0 : i32
    %c0_i32_1 = arith.constant 0 : i32
    %c0_i32_2 = arith.constant 0 : i32
    return %c0_i32, %c0_i32_0, %c0_i32_1 : i32, i32, i32
  }
  func.func @transform_9(%arg0: i32) -> (i32, i32, i32) {
    %c0_i32 = arith.constant 0 : i32
    %c0_i32_0 = arith.constant 0 : i32
    %c0_i32_1 = arith.constant 0 : i32
    %c0_i32_2 = arith.constant 0 : i32
    return %c0_i32, %c0_i32_0, %c0_i32_1 : i32, i32, i32
  }
  func.func @transform_10(%arg0: i32) -> (i32, i32) {
    %c0_i32 = arith.constant 0 : i32
    %c0_i32_0 = arith.constant 0 : i32
    %c0_i32_1 = arith.constant 0 : i32
    return %c0_i32, %c0_i32_0 : i32, i32
  }
  func.func @transform_11(%arg0: i32) -> (i32, i32) {
    %c0_i32 = arith.constant 0 : i32
    %c0_i32_0 = arith.constant 0 : i32
    %c0_i32_1 = arith.constant 0 : i32
    return %c0_i32, %c0_i32_0 : i32, i32
  }
  func.func @transform_12(%arg0: i32) -> (i32, i32) {
    %c0_i32 = arith.constant 0 : i32
    %c0_i32_0 = arith.constant 0 : i32
    %c0_i32_1 = arith.constant 0 : i32
    return %c0_i32, %c0_i32_0 : i32, i32
  }
  func.func @transform_13(%arg0: i32) -> (i32, i32) {
    %c0_i32 = arith.constant 0 : i32
    %c0_i32_0 = arith.constant 0 : i32
    %c0_i32_1 = arith.constant 0 : i32
    return %c0_i32, %c0_i32_0 : i32, i32
  }
  func.func @transform_14(%arg0: i32) -> (i32, i32, i32) {
    %c0_i32 = arith.constant 0 : i32
    %c0_i32_0 = arith.constant 0 : i32
    %c0_i32_1 = arith.constant 0 : i32
    return %arg0, %c0_i32, %c0_i32_0 : i32, i32, i32
  }
}

</mosaic_0001>

<llo_original>
// kernel: tpu_custom_call.1
$region0: #{tpu_custom_call.1}
  #allocation0 [shape = 'u32[]', space=smem, size = 0x4, offset = 0x4, fixed_abs, tag = 'smem constant byte address 0x4 - core index']
  #allocation1 [shape = 'u32[72,128]{1,0:T(1,128)}', space=vmem, size = 0x9000, scoped, tag = 'internal scratch']
  %s0 = inlined_call_operand.vmem [shape: f32[16,32], index: 0, kind: input, shape index: {}]
  %s1 = inlined_call_operand.vmem [shape: f32[2,1,8], index: 1, kind: input, shape index: {}]
  %s2 = inlined_call_operand.vmem [shape: f32[2,32], index: 2, kind: input, shape index: {}]
  %s3 = inlined_call_operand.vmem [shape: bf16[6,4,32,8], index: 3, kind: input, shape index: {}]
  %s4 = inlined_call_operand.vmem [shape: f32[6,4,1,8], index: 4, kind: input, shape index: {}]
  %s5 = inlined_call_operand.vmem [shape: bf16[2,4,8,32], index: 5, kind: input, shape index: {}]
  %s6 = inlined_call_operand.vmem [shape: bf16[2,32,64], index: 6, kind: input, shape index: {}]
  %s7 = inlined_call_operand.vmem [shape: f32[2,1,64], index: 7, kind: input, shape index: {}]
  %s8 = inlined_call_operand.vmem [shape: bf16[2,64,32], index: 8, kind: input, shape index: {}]
  %s9 = inlined_call_operand.vmem [shape: f32[2,6,32], index: 9, kind: input, shape index: {}]
  %s10 = inlined_call_operand.vmem [shape: bf16[32,256], index: 10, kind: input, shape index: {}]
  %s11 = inlined_call_operand.vmem [shape: f32[1,256], index: 11, kind: input, shape index: {}]
  %s12 = inlined_call_operand.vmem [shape: bf16[256,128], index: 12, kind: input, shape index: {}]
  %s13 = inlined_call_operand.vmem [shape: f32[1,128], index: 13, kind: input, shape index: {}]
  %s14 = inlined_call_operand.hbm [shape: f32[2,1,128], index: 14, kind: output, shape index: {}]
  %s15 = sld [smem:[#allocation0]]
  $region89: #{tpu_custom_call.1} parent=0
    _
  %s17 = ssub.s32 1, %s15
  %s18 = scalar_select 0, %s17, %s15
  $region1: #{tpu_custom_call.1} parent=0
    #allocation2 [shape = 'u8[1024]{0}', space=vmem, size = 0x400, scoped, tag = 'output window, operand 0']
    #allocation3 [shape = 's32[2]{0}', space=sflag, size = 0x8, scoped, tag = 'scoped memory for tpu_custom_call.1']
    %19 = vsyncpa [#allocation3], 0
    %s20 = scalar_lea.sflag [#allocation3], 1
    %21 = vsyncpa %s20, 0
    loop: start=0, step=1, limit=4
    $region2: #{tpu_custom_call.1} parent=1 // loop_pre_header
      _
    $region3: #{tpu_custom_call.1} parent=1 // loop_header
      %s23 = sphi 0, %s27
      %p24 = scmp.ge.s32.totalorder %s23, 4
      %s33 = sphi 0, %s35
      %s36 = sphi 0, %s33
      %s37 = sphi 0, %s36
      %s53 = sphi 0, %s37
      %s59 = sphi 0, %s61
      %s62 = sphi 0, %s59
      %s63 = sphi 0, %s62
      %s79 = sphi 0, %s63
      %s83 = sphi 0, %s83
      %s85 = sphi 0, %s83
      %s86 = sphi 0, %s85
      %s100 = sphi 0, %s86
      %s104 = sphi 0, %s104
      %s106 = sphi 0, %s104
      %s107 = sphi 0, %s106
      %s121 = sphi 0, %s107
      %s125 = sphi 0, %s125
      %s127 = sphi 0, %s125
      %s128 = sphi 0, %s127
      %s142 = sphi 0, %s128
      %s146 = sphi 0, %s146
      %s148 = sphi 0, %s146
      %s149 = sphi 0, %s148
      %s163 = sphi 0, %s149
      %s167 = sphi 0, %s167
      %s169 = sphi 0, %s167
      %s170 = sphi 0, %s169
      %s184 = sphi 0, %s170
      %s188 = sphi 0, %s188
      %s190 = sphi 0, %s188
      %s191 = sphi 0, %s190
      %s205 = sphi 0, %s191
      %s209 = sphi 0, %s209
      %s211 = sphi 0, %s209
      %s212 = sphi 0, %s211
      %s226 = sphi 0, %s212
      %s230 = sphi 0, %s230
      %s232 = sphi 0, %s230
      %s233 = sphi 0, %s232
      %s247 = sphi 0, %s233
      %s251 = sphi 0, %s251
      %s253 = sphi 0, %s251
      %s254 = sphi 0, %s253
      %s268 = sphi 0, %s254
      %s272 = sphi 0, %s272
      %s274 = sphi 0, %s272
      %s275 = sphi 0, %s274
      %s289 = sphi 0, %s275
      %s293 = sphi 0, %s293
      %s295 = sphi 0, %s293
      %s296 = sphi 0, %s295
      %s310 = sphi 0, %s296
      %s314 = sphi 0, %s314
      %s316 = sphi 0, %s314
      %s317 = sphi 0, %s316
      %s331 = sphi 0, %s317
      %s337 = sphi 0, %s339
      %s340 = sphi 0, %s337
      %s341 = sphi 0, %s340
      %s357 = sphi 0, %s341
    $region4: #{tpu_custom_call.1} parent=1 // loop_header_branch
      %26 = sbr.rel (%p24) target = $region8
    $region5: #{tpu_custom_call.1} parent=1 // loop_body
      %s28 = ssub.s32 %s23, 1
      %s29 = ssub.s32 %s23, 2
      %s30 = sadd.s32 %s23, 1
      %s31 = ssub.s32 %s23, %s30
      %p32 = scmp.eq.s32.totalorder %s31, 0
      %s34 = sadd.s32 %s33, 1
      %s35 = scalar_select %p32, %s33, %s34
      %p38 = pneg %p32
      %p39 = scmp.eq.s32.totalorder %s23, 1
      %p40 = por %p38, %p39
      %p41 = scmp.ne.s32.totalorder %s33, %s36
      %p42 = scmp.eq.s32.totalorder %s23, 0
      %p43 = por %p41, %p42
      %p44 = scmp.ne.s32.totalorder %s33, %s36
      %p45 = scmp.eq.s32.totalorder %s28, 1
      %p46 = por %p44, %p45
      %p47 = scmp.ne.s32.totalorder %s36, %s37
      %p48 = scmp.eq.s32.totalorder %s28, 0
      %p49 = por %p47, %p48
      %p50 = scmp.ne.s32.totalorder %s36, %s37
      %p51 = scmp.eq.s32.totalorder %s29, 1
      %p52 = por %p50, %p51
      %p54 = scmp.ne.s32.totalorder %s37, %s53
      %p55 = scmp.eq.s32.totalorder %s29, 0
      %p56 = por %p54, %p55
      %s57 = ssub.s32 %s23, %s30
      %p58 = scmp.eq.s32.totalorder %s57, 0
      %s60 = sadd.s32 %s59, 1
      %s61 = scalar_select %p58, %s59, %s60
      %p64 = pneg %p58
      %p65 = scmp.eq.s32.totalorder %s23, 1
      %p66 = por %p64, %p65
      %p67 = scmp.ne.s32.totalorder %s59, %s62
      %p68 = scmp.eq.s32.totalorder %s23, 0
      %p69 = por %p67, %p68
      %p70 = scmp.ne.s32.totalorder %s59, %s62
      %p71 = scmp.eq.s32.totalorder %s28, 1
      %p72 = por %p70, %p71
      %p73 = scmp.ne.s32.totalorder %s62, %s63
      %p74 = scmp.eq.s32.totalorder %s28, 0
      %p75 = por %p73, %p74
      %p76 = scmp.ne.s32.totalorder %s62, %s63
      %p77 = scmp.eq.s32.totalorder %s29, 1
      %p78 = por %p76, %p77
      %p80 = scmp.ne.s32.totalorder %s63, %s79
      %p81 = scmp.eq.s32.totalorder %s29, 0
      %p82 = por %p80, %p81
      %s84 = sadd.s32 %s83, 1
      %p87 = scmp.eq.s32.totalorder %s23, 1
      %p88 = scmp.ne.s32.totalorder %s83, %s85
      %p89 = scmp.eq.s32.totalorder %s23, 0
      %p90 = por %p88, %p89
      %p91 = scmp.ne.s32.totalorder %s83, %s85
      %p92 = scmp.eq.s32.totalorder %s28, 1
      %p93 = por %p91, %p92
      %p94 = scmp.ne.s32.totalorder %s85, %s86
      %p95 = scmp.eq.s32.totalorder %s28, 0
      %p96 = por %p94, %p95
      %p97 = scmp.ne.s32.totalorder %s85, %s86
      %p98 = scmp.eq.s32.totalorder %s29, 1
      %p99 = por %p97, %p98
      %p101 = scmp.ne.s32.totalorder %s86, %s100
      %p102 = scmp.eq.s32.totalorder %s29, 0
      %p103 = por %p101, %p102
      %s105 = sadd.s32 %s104, 1
      %p108 = scmp.eq.s32.totalorder %s23, 1
      %p109 = scmp.ne.s32.totalorder %s104, %s106
      %p110 = scmp.eq.s32.totalorder %s23, 0
      %p111 = por %p109, %p110
      %p112 = scmp.ne.s32.totalorder %s104, %s106
      %p113 = scmp.eq.s32.totalorder %s28, 1
      %p114 = por %p112, %p113
      %p115 = scmp.ne.s32.totalorder %s106, %s107
      %p116 = scmp.eq.s32.totalorder %s28, 0
      %p117 = por %p115, %p116
      %p118 = scmp.ne.s32.totalorder %s106, %s107
      %p119 = scmp.eq.s32.totalorder %s29, 1
      %p120 = por %p118, %p119
      %p122 = scmp.ne.s32.totalorder %s107, %s121
      %p123 = scmp.eq.s32.totalorder %s29, 0
      %p124 = por %p122, %p123
      %s126 = sadd.s32 %s125, 1
      %p129 = scmp.eq.s32.totalorder %s23, 1
      %p130 = scmp.ne.s32.totalorder %s125, %s127
      %p131 = scmp.eq.s32.totalorder %s23, 0
      %p132 = por %p130, %p131
      %p133 = scmp.ne.s32.totalorder %s125, %s127
      %p134 = scmp.eq.s32.totalorder %s28, 1
      %p135 = por %p133, %p134
      %p136 = scmp.ne.s32.totalorder %s127, %s128
      %p137 = scmp.eq.s32.totalorder %s28, 0
      %p138 = por %p136, %p137
      %p139 = scmp.ne.s32.totalorder %s127, %s128
      %p140 = scmp.eq.s32.totalorder %s29, 1
      %p141 = por %p139, %p140
      %p143 = scmp.ne.s32.totalorder %s128, %s142
      %p144 = scmp.eq.s32.totalorder %s29, 0
      %p145 = por %p143, %p144
      %s147 = sadd.s32 %s146, 1
      %p150 = scmp.eq.s32.totalorder %s23, 1
      %p151 = scmp.ne.s32.totalorder %s146, %s148
      %p152 = scmp.eq.s32.totalorder %s23, 0
      %p153 = por %p151, %p152
      %p154 = scmp.ne.s32.totalorder %s146, %s148
      %p155 = scmp.eq.s32.totalorder %s28, 1
      %p156 = por %p154, %p155
      %p157 = scmp.ne.s32.totalorder %s148, %s149
      %p158 = scmp.eq.s32.totalorder %s28, 0
      %p159 = por %p157, %p158
      %p160 = scmp.ne.s32.totalorder %s148, %s149
      %p161 = scmp.eq.s32.totalorder %s29, 1
      %p162 = por %p160, %p161
      %p164 = scmp.ne.s32.totalorder %s149, %s163
      %p165 = scmp.eq.s32.totalorder %s29, 0
      %p166 = por %p164, %p165
      %s168 = sadd.s32 %s167, 1
      %p171 = scmp.eq.s32.totalorder %s23, 1
      %p172 = scmp.ne.s32.totalorder %s167, %s169
      %p173 = scmp.eq.s32.totalorder %s23, 0
      %p174 = por %p172, %p173
      %p175 = scmp.ne.s32.totalorder %s167, %s169
      %p176 = scmp.eq.s32.totalorder %s28, 1
      %p177 = por %p175, %p176
      %p178 = scmp.ne.s32.totalorder %s169, %s170
      %p179 = scmp.eq.s32.totalorder %s28, 0
      %p180 = por %p178, %p179
      %p181 = scmp.ne.s32.totalorder %s169, %s170
      %p182 = scmp.eq.s32.totalorder %s29, 1
      %p183 = por %p181, %p182
      %p185 = scmp.ne.s32.totalorder %s170, %s184
      %p186 = scmp.eq.s32.totalorder %s29, 0
      %p187 = por %p185, %p186
      %s189 = sadd.s32 %s188, 1
      %p192 = scmp.eq.s32.totalorder %s23, 1
      %p193 = scmp.ne.s32.totalorder %s188, %s190
      %p194 = scmp.eq.s32.totalorder %s23, 0
      %p195 = por %p193, %p194
      %p196 = scmp.ne.s32.totalorder %s188, %s190
      %p197 = scmp.eq.s32.totalorder %s28, 1
      %p198 = por %p196, %p197
      %p199 = scmp.ne.s32.totalorder %s190, %s191
      %p200 = scmp.eq.s32.totalorder %s28, 0
      %p201 = por %p199, %p200
      %p202 = scmp.ne.s32.totalorder %s190, %s191
      %p203 = scmp.eq.s32.totalorder %s29, 1
      %p204 = por %p202, %p203
      %p206 = scmp.ne.s32.totalorder %s191, %s205
      %p207 = scmp.eq.s32.totalorder %s29, 0
      %p208 = por %p206, %p207
      %s210 = sadd.s32 %s209, 1
      %p213 = scmp.eq.s32.totalorder %s23, 1
      %p214 = scmp.ne.s32.totalorder %s209, %s211
      %p215 = scmp.eq.s32.totalorder %s23, 0
      %p216 = por %p214, %p215
      %p217 = scmp.ne.s32.totalorder %s209, %s211
      %p218 = scmp.eq.s32.totalorder %s28, 1
      %p219 = por %p217, %p218
      %p220 = scmp.ne.s32.totalorder %s211, %s212
      %p221 = scmp.eq.s32.totalorder %s28, 0
      %p222 = por %p220, %p221
      %p223 = scmp.ne.s32.totalorder %s211, %s212
      %p224 = scmp.eq.s32.totalorder %s29, 1
      %p225 = por %p223, %p224
      %p227 = scmp.ne.s32.totalorder %s212, %s226
      %p228 = scmp.eq.s32.totalorder %s29, 0
      %p229 = por %p227, %p228
      %s231 = sadd.s32 %s230, 1
      %p234 = scmp.eq.s32.totalorder %s23, 1
      %p235 = scmp.ne.s32.totalorder %s230, %s232
      %p236 = scmp.eq.s32.totalorder %s23, 0
      %p237 = por %p235, %p236
      %p238 = scmp.ne.s32.totalorder %s230, %s232
      %p239 = scmp.eq.s32.totalorder %s28, 1
      %p240 = por %p238, %p239
      %p241 = scmp.ne.s32.totalorder %s232, %s233
      %p242 = scmp.eq.s32.totalorder %s28, 0
      %p243 = por %p241, %p242
      %p244 = scmp.ne.s32.totalorder %s232, %s233
      %p245 = scmp.eq.s32.totalorder %s29, 1
      %p246 = por %p244, %p245
      %p248 = scmp.ne.s32.totalorder %s233, %s247
      %p249 = scmp.eq.s32.totalorder %s29, 0
      %p250 = por %p248, %p249
      %s252 = sadd.s32 %s251, 1
      %p255 = scmp.eq.s32.totalorder %s23, 1
      %p256 = scmp.ne.s32.totalorder %s251, %s253
      %p257 = scmp.eq.s32.totalorder %s23, 0
      %p258 = por %p256, %p257
      %p259 = scmp.ne.s32.totalorder %s251, %s253
      %p260 = scmp.eq.s32.totalorder %s28, 1
      %p261 = por %p259, %p260
      %p262 = scmp.ne.s32.totalorder %s253, %s254
      %p263 = scmp.eq.s32.totalorder %s28, 0
      %p264 = por %p262, %p263
      %p265 = scmp.ne.s32.totalorder %s253, %s254
      %p266 = scmp.eq.s32.totalorder %s29, 1
      %p267 = por %p265, %p266
      %p269 = scmp.ne.s32.totalorder %s254, %s268
      %p270 = scmp.eq.s32.totalorder %s29, 0
      %p271 = por %p269, %p270
      %s273 = sadd.s32 %s272, 1
      %p276 = scmp.eq.s32.totalorder %s23, 1
      %p277 = scmp.ne.s32.totalorder %s272, %s274
      %p278 = scmp.eq.s32.totalorder %s23, 0
      %p279 = por %p277, %p278
      %p280 = scmp.ne.s32.totalorder %s272, %s274
      %p281 = scmp.eq.s32.totalorder %s28, 1
      %p282 = por %p280, %p281
      %p283 = scmp.ne.s32.totalorder %s274, %s275
      %p284 = scmp.eq.s32.totalorder %s28, 0
      %p285 = por %p283, %p284
      %p286 = scmp.ne.s32.totalorder %s274, %s275
      %p287 = scmp.eq.s32.totalorder %s29, 1
      %p288 = por %p286, %p287
      %p290 = scmp.ne.s32.totalorder %s275, %s289
      %p291 = scmp.eq.s32.totalorder %s29, 0
      %p292 = por %p290, %p291
      %s294 = sadd.s32 %s293, 1
      %p297 = scmp.eq.s32.totalorder %s23, 1
      %p298 = scmp.ne.s32.totalorder %s293, %s295
      %p299 = scmp.eq.s32.totalorder %s23, 0
      %p300 = por %p298, %p299
      %p301 = scmp.ne.s32.totalorder %s293, %s295
      %p302 = scmp.eq.s32.totalorder %s28, 1
      %p303 = por %p301, %p302
      %p304 = scmp.ne.s32.totalorder %s295, %s296
      %p305 = scmp.eq.s32.totalorder %s28, 0
      %p306 = por %p304, %p305
      %p307 = scmp.ne.s32.totalorder %s295, %s296
      %p308 = scmp.eq.s32.totalorder %s29, 1
      %p309 = por %p307, %p308
      %p311 = scmp.ne.s32.totalorder %s296, %s310
      %p312 = scmp.eq.s32.totalorder %s29, 0
      %p313 = por %p311, %p312
      %s315 = sadd.s32 %s314, 1
      %p318 = scmp.eq.s32.totalorder %s23, 1
      %p319 = scmp.ne.s32.totalorder %s314, %s316
      %p320 = scmp.eq.s32.totalorder %s23, 0
      %p321 = por %p319, %p320
      %p322 = scmp.ne.s32.totalorder %s314, %s316
      %p323 = scmp.eq.s32.totalorder %s28, 1
      %p324 = por %p322, %p323
      %p325 = scmp.ne.s32.totalorder %s316, %s317
      %p326 = scmp.eq.s32.totalorder %s28, 0
      %p327 = por %p325, %p326
      %p328 = scmp.ne.s32.totalorder %s316, %s317
      %p329 = scmp.eq.s32.totalorder %s29, 1
      %p330 = por %p328, %p329
      %p332 = scmp.ne.s32.totalorder %s317, %s331
      %p333 = scmp.eq.s32.totalorder %s29, 0
      %p334 = por %p332, %p333
      %s335 = ssub.s32 %s23, %s30
      %p336 = scmp.eq.s32.totalorder %s335, 0
      %s338 = sadd.s32 %s337, 1
      %s339 = scalar_select %p336, %s337, %s338
      %p342 = pneg %p336
      %p343 = scmp.eq.s32.totalorder %s23, 1
      %p344 = por %p342, %p343
      %p345 = scmp.ne.s32.totalorder %s337, %s340
      %p346 = scmp.eq.s32.totalorder %s23, 0
      %p347 = por %p345, %p346
      %p348 = scmp.ne.s32.totalorder %s337, %s340
      %p349 = scmp.eq.s32.totalorder %s28, 1
      %p350 = por %p348, %p349
      %p351 = scmp.ne.s32.totalorder %s340, %s341
      %p352 = scmp.eq.s32.totalorder %s28, 0
      %p353 = por %p351, %p352
      %p354 = scmp.ne.s32.totalorder %s340, %s341
      %p355 = scmp.eq.s32.totalorder %s29, 1
      %p356 = por %p354, %p355
      %p358 = scmp.ne.s32.totalorder %s341, %s357
      %p359 = scmp.eq.s32.totalorder %s29, 0
      %p360 = por %p358, %p359
      %p361 = scmp.le.s32.totalorder 1, %s23
      %p362 = scmp.lt.s32.totalorder %s23, 3
      %p363 = pnand %p361, %p362
      %p364 = pneg %p363
      // Predicated region
      $region9: #{tpu_custom_call.1} parent=5 // pred_check
        _
      $region10: #{tpu_custom_call.1} parent=5 // pred_check_branch
        %366 = sbr.rel (%p363) target = $region12
      $region11: #{tpu_custom_call.1} parent=5 // pred_region
        %s367 = ssub.s32 %s23, 1
        // Predicated region
        $region13: #{tpu_custom_call.1} parent=11 // pred_check
          %p368 = pneg %p96
        $region14: #{tpu_custom_call.1} parent=11 // pred_check_branch
          %370 = sbr.rel (%p368) target = $region16
        $region15: #{tpu_custom_call.1} parent=11 // pred_region
          _
        $region16: #{tpu_custom_call.1} parent=11 // pred_fallthru
          _
        // Predicated region
        $region17: #{tpu_custom_call.1} parent=11 // pred_check
          %p371 = pneg %p117
        $region18: #{tpu_custom_call.1} parent=11 // pred_check_branch
          %373 = sbr.rel (%p371) target = $region20
        $region19: #{tpu_custom_call.1} parent=11 // pred_region
          _
        $region20: #{tpu_custom_call.1} parent=11 // pred_fallthru
          _
        // Predicated region
        $region21: #{tpu_custom_call.1} parent=11 // pred_check
          %p374 = pneg %p138
        $region22: #{tpu_custom_call.1} parent=11 // pred_check_branch
          %376 = sbr.rel (%p374) target = $region24
        $region23: #{tpu_custom_call.1} parent=11 // pred_region
          _
        $region24: #{tpu_custom_call.1} parent=11 // pred_fallthru
          _
        // Predicated region
        $region25: #{tpu_custom_call.1} parent=11 // pred_check
          %p377 = pneg %p159
        $region26: #{tpu_custom_call.1} parent=11 // pred_check_branch
          %379 = sbr.rel (%p377) target = $region28
        $region27: #{tpu_custom_call.1} parent=11 // pred_region
          _
        $region28: #{tpu_custom_call.1} parent=11 // pred_fallthru
          _
        // Predicated region
        $region29: #{tpu_custom_call.1} parent=11 // pred_check
          %p380 = pneg %p180
        $region30: #{tpu_custom_call.1} parent=11 // pred_check_branch
          %382 = sbr.rel (%p380) target = $region32
        $region31: #{tpu_custom_call.1} parent=11 // pred_region
          _
        $region32: #{tpu_custom_call.1} parent=11 // pred_fallthru
          _
        // Predicated region
        $region33: #{tpu_custom_call.1} parent=11 // pred_check
          %p383 = pneg %p201
        $region34: #{tpu_custom_call.1} parent=11 // pred_check_branch
          %385 = sbr.rel (%p383) target = $region36
        $region35: #{tpu_custom_call.1} parent=11 // pred_region
          _
        $region36: #{tpu_custom_call.1} parent=11 // pred_fallthru
          _
        // Predicated region
        $region37: #{tpu_custom_call.1} parent=11 // pred_check
          %p386 = pneg %p222
        $region38: #{tpu_custom_call.1} parent=11 // pred_check_branch
          %388 = sbr.rel (%p386) target = $region40
        $region39: #{tpu_custom_call.1} parent=11 // pred_region
          _
        $region40: #{tpu_custom_call.1} parent=11 // pred_fallthru
          _
        // Predicated region
        $region41: #{tpu_custom_call.1} parent=11 // pred_check
          %p389 = pneg %p243
        $region42: #{tpu_custom_call.1} parent=11 // pred_check_branch
          %391 = sbr.rel (%p389) target = $region44
        $region43: #{tpu_custom_call.1} parent=11 // pred_region
          _
        $region44: #{tpu_custom_call.1} parent=11 // pred_fallthru
          _
        // Predicated region
        $region45: #{tpu_custom_call.1} parent=11 // pred_check
          %p392 = pneg %p264
        $region46: #{tpu_custom_call.1} parent=11 // pred_check_branch
          %394 = sbr.rel (%p392) target = $region48
        $region47: #{tpu_custom_call.1} parent=11 // pred_region
          _
        $region48: #{tpu_custom_call.1} parent=11 // pred_fallthru
          _
        // Predicated region
        $region49: #{tpu_custom_call.1} parent=11 // pred_check
          %p395 = pneg %p285
        $region50: #{tpu_custom_call.1} parent=11 // pred_check_branch
          %397 = sbr.rel (%p395) target = $region52
        $region51: #{tpu_custom_call.1} parent=11 // pred_region
          _
        $region52: #{tpu_custom_call.1} parent=11 // pred_fallthru
          _
        // Predicated region
        $region53: #{tpu_custom_call.1} parent=11 // pred_check
          %p398 = pneg %p306
        $region54: #{tpu_custom_call.1} parent=11 // pred_check_branch
          %400 = sbr.rel (%p398) target = $region56
        $region55: #{tpu_custom_call.1} parent=11 // pred_region
          _
        $region56: #{tpu_custom_call.1} parent=11 // pred_fallthru
          _
        // Predicated region
        $region57: #{tpu_custom_call.1} parent=11 // pred_check
          %p401 = pneg %p327
        $region58: #{tpu_custom_call.1} parent=11 // pred_check_branch
          %403 = sbr.rel (%p401) target = $region60
        $region59: #{tpu_custom_call.1} parent=11 // pred_region
          _
        $region60: #{tpu_custom_call.1} parent=11 // pred_fallthru
          _
      $region12: #{tpu_custom_call.1} parent=5 // pred_fallthru
        _
      %p404 = scmp.lt.s32.totalorder %s23, 2
      // Predicated region
      $region61: #{tpu_custom_call.1} parent=5 // pred_check
        %p405 = pneg %p404
      $region62: #{tpu_custom_call.1} parent=5 // pred_check_branch
        %407 = sbr.rel (%p405) target = $region64
      $region63: #{tpu_custom_call.1} parent=5 // pred_region
        // Predicated region
        $region65: #{tpu_custom_call.1} parent=63 // pred_check
          %p408 = pneg %p43
        $region66: #{tpu_custom_call.1} parent=63 // pred_check_branch
          %410 = sbr.rel (%p408) target = $region68
        $region67: #{tpu_custom_call.1} parent=63 // pred_region
          %p411 = scmp.lt.s32.totalorder %s23, 1
          %s412 = scalar_select %p411, %s23, 1
          %s413 = smul.addr %s412, 8
          %s414 = scalar_lea.vmem %s0, %s413
        $region68: #{tpu_custom_call.1} parent=63 // pred_fallthru
          _
        // Predicated region
        $region69: #{tpu_custom_call.1} parent=63 // pred_check
          %p415 = pneg %p69
        $region70: #{tpu_custom_call.1} parent=63 // pred_check_branch
          %417 = sbr.rel (%p415) target = $region72
        $region71: #{tpu_custom_call.1} parent=63 // pred_region
          %p418 = scmp.lt.s32.totalorder %s23, 1
          %s419 = scalar_select %p418, %s23, 1
          %s420 = scalar_lea.vmem %s1, %s419
        $region72: #{tpu_custom_call.1} parent=63 // pred_fallthru
          _
      $region64: #{tpu_custom_call.1} parent=5 // pred_fallthru
        _
      %p421 = scmp.le.s32.totalorder 1, %s23
      %p422 = scmp.lt.s32.totalorder %s23, 3
      %p423 = pnand %p421, %p422
      %p424 = pneg %p423
      // Predicated region
      $region73: #{tpu_custom_call.1} parent=5 // pred_check
        _
      $region74: #{tpu_custom_call.1} parent=5 // pred_check_branch
        %426 = sbr.rel (%p423) target = $region76
      $region75: #{tpu_custom_call.1} parent=5 // pred_region
        %s427 = ssub.s32 %s23, 1
        %p428 = scmp.lt.s32.totalorder %s28, 1
        %s429 = scalar_select %p428, %s28, 1
        %s430 = smul.addr %s429, 8
        %s431 = scalar_lea.vmem %s0, %s430
        %p432 = pneg %p49
        %p433 = pneg %p46
        %p434 = scmp.lt.s32.totalorder %s28, 1
        %s435 = scalar_select %p434, %s28, 1
        %s436 = scalar_lea.vmem %s1, %s435
        %p437 = pneg %p75
        %p438 = pneg %p72
        %p439 = pneg %p96
        %p440 = pneg %p93
        %p441 = pneg %p117
        %p442 = pneg %p114
        %p443 = pneg %p138
        %p444 = pneg %p135
        %p445 = pneg %p159
        %p446 = pneg %p156
        %p447 = pneg %p180
        %p448 = pneg %p177
        %p449 = pneg %p201
        %p450 = pneg %p198
        %p451 = pneg %p222
        %p452 = pneg %p219
        %p453 = pneg %p243
        %p454 = pneg %p240
        %p455 = pneg %p264
        %p456 = pneg %p261
        %p457 = pneg %p285
        %p458 = pneg %p282
        %p459 = pneg %p306
        %p460 = pneg %p303
        %p461 = pneg %p327
        %p462 = pneg %p324
        %p463 = pneg %p353
        %p464 = pneg %p350
        %s465 = sand.u32 %s340, 1
        %s466 = scalar_lea.sflag [#allocation3], %s465
        %s467 = sand.u32 %s340, 1
        %s468 = scalar_lea.vmem [#allocation2], %s467
        %p469 = scmp.lt.s32.totalorder %s28, 1
        %s470 = scalar_select %p469, %s28, 1
        %s471 = smul.addr %s470, 8
        %s472 = scalar_lea.vmem %s0, %s471
        %p473 = scmp.lt.s32.totalorder %s28, 1
        %s474 = scalar_select %p473, %s28, 1
        %s475 = scalar_lea.vmem %s1, %s474
        %v477 = vld [vmem:[%s472] sm:$0xff]
        %v478 = vld [vmem:[%s2] sm:$0x1]
        %v479 = vld [vmem:[%s2 + $0x1] sm:$0x1]
        %vm480 = vcmask 261120
        %v481 = vsel %vm480, %v477, 0.0
        %482 = vadd.xlane.f32.xlu0 %v481
        %v483 = vpop.xlane.xlu0 %482
        %v484 = vrcp.pop 32.0
        %v485 = vmul.f32 32.0, %v484
        %v486 = vsub.f32 1.0, %v485
        %v487 = vmul.f32 %v484, %v486
        %v488 = vadd.f32 %v484, %v487
        %vm489 = vweird.f32 %v484
        %v490 = vsel %vm489, %v484, %v488
        %v491 = vmul.f32 %v483, %v490
        %v492 = vsub.f32 %v477, %v491
        %v493 = vmul.f32 %v492, %v492
        %v494 = vsel %vm480, %v493, 0.0
        %495 = vadd.xlane.f32.xlu0 %v494
        %v496 = vpop.xlane.xlu0 %495
        %v497 = vmul.f32 %v496, %v490
        %v498 = vadd.f32 %v497, 1e-05
        %v499 = vrsqrt.pop %v498
        %v500 = vmul.f32 %v499, %v498
        %v501 = vmul.f32 %v500, %v499
        %v502 = vmul.f32 0.5, %v501
        %v503 = vsub.f32 1.5, %v502
        %v504 = vmul.f32 %v499, %v503
        %vm505 = vweird.f32 %v498
        %vm506 = vweird.f32 %v499
        %vm507 = vmor %vm505, %vm506
        %v508 = vsel %vm507, %v499, %v504
        %v509 = vmul.f32 %v492, %v508
        %v510 = vperm.slane %v478, 0
        %v511 = vmul.f32 %v509, %v510
        %v512 = vperm.slane %v479, 0
        %v513 = vadd.f32 %v511, %v512
        %v514 = vld [vmem:[%s475] sm:$0x1]
        %v516 = vperm.slane %v514, 0
        %v518 = vpack.c.bf16 %v513, %v513
        %v519 = vld [vmem:[%s3] sm:$0xf]
        %v520 = vld [vmem:[%s3 + $0x4] sm:$0xf]
        %v521 = vld [vmem:[%s3 + $0x8] sm:$0xf]
        %v522 = vld [vmem:[%s3 + $0xc] sm:$0xf]
        %v523 = vld [vmem:[%s3 + $0x10] sm:$0xf]
        %v524 = vld [vmem:[%s3 + $0x14] sm:$0xf]
        %v525 = vld [vmem:[%s3 + $0x18] sm:$0xf]
        %v526 = vld [vmem:[%s3 + $0x1c] sm:$0xf]
        %v527 = vld [vmem:[%s3 + $0x20] sm:$0xf]
        %v528 = vld [vmem:[%s3 + $0x24] sm:$0xf]
        %v529 = vld [vmem:[%s3 + $0x28] sm:$0xf]
        %v530 = vld [vmem:[%s3 + $0x2c] sm:$0xf]
        %v531 = vld [vmem:[%s3 + $0x30] sm:$0xf]
        %v532 = vld [vmem:[%s3 + $0x34] sm:$0xf]
        %v533 = vld [vmem:[%s3 + $0x38] sm:$0xf]
        %v534 = vld [vmem:[%s3 + $0x3c] sm:$0xf]
        %v535 = vld [vmem:[%s4] sm:$0x1]
        %v536 = vld [vmem:[%s4 + $0x1] sm:$0x1]
        %v537 = vld [vmem:[%s4 + $0x2] sm:$0x1]
        %v538 = vld [vmem:[%s4 + $0x3] sm:$0x1]
        %v543 = vperm.slane %v535, 0
        %v544 = vperm.slane %v536, 0
        %v545 = vperm.slane %v537, 0
        %v546 = vperm.slane %v538, 0
        %v555 = vunpack.c.l.b16 %v519
        %v556 = vunpack.c.l.b16 %v520
        %v557 = vunpack.c.l.b16 %v521
        %v558 = vunpack.c.l.b16 %v522
        %v559 = vpack.c.b16 %v556, %v555
        %v560 = vpack.c.b16 %v558, %v557
        %v564 = vsel %vm480, %v518, 0
        %566 = vmatpush.bf16.msra.mxu0 0
        %567 = vmatpush.bf16.msra.mxu0 0
        %568 = vmatpush.bf16.msra.mxu0 0
        %569 = vmatpush.bf16.msra.mxu0 0
        %570 = vmatpush.bf16.msra.mxu0 0
        %571 = vmatpush.bf16.msra.mxu0 0
        %572 = vmatpush.bf16.msra.mxu0 %v560
        %573 = vmatpush.bf16.msra.mxu0 %v559
        %574 = vmatmul.bf16.gmra.mxu0 %v564
        %v575 = vpop.f32.mrf.mxu0
        %v576 = vadd.f32 %v543, %v575
        %v577 = vpop.f32.mrf.mxu0
        %578 = vdwg.mxu0
        %v583 = vunpack.c.l.b16 %v523
        %v584 = vunpack.c.l.b16 %v524
        %v585 = vunpack.c.l.b16 %v525
        %v586 = vunpack.c.l.b16 %v526
        %v587 = vpack.c.b16 %v584, %v583
        %v588 = vpack.c.b16 %v586, %v585
        %591 = vmatpush.bf16.msra.mxu0 0
        %592 = vmatpush.bf16.msra.mxu0 0
        %593 = vmatpush.bf16.msra.mxu0 0
        %594 = vmatpush.bf16.msra.mxu0 0
        %595 = vmatpush.bf16.msra.mxu0 0
        %596 = vmatpush.bf16.msra.mxu0 0
        %597 = vmatpush.bf16.msra.mxu0 %v588
        %598 = vmatpush.bf16.msra.mxu0 %v587
        %599 = vmatmul.bf16.gmra.mxu0 %v564
        %v600 = vpop.f32.mrf.mxu0
        %v601 = vadd.f32 %v544, %v600
        %v602 = vpop.f32.mrf.mxu0
        %603 = vdwg.mxu0
        %v608 = vunpack.c.l.b16 %v527
        %v609 = vunpack.c.l.b16 %v528
        %v610 = vunpack.c.l.b16 %v529
        %v611 = vunpack.c.l.b16 %v530
        %v612 = vpack.c.b16 %v609, %v608
        %v613 = vpack.c.b16 %v611, %v610
        %616 = vmatpush.bf16.msra.mxu0 0
        %617 = vmatpush.bf16.msra.mxu0 0
        %618 = vmatpush.bf16.msra.mxu0 0
        %619 = vmatpush.bf16.msra.mxu0 0
        %620 = vmatpush.bf16.msra.mxu0 0
        %621 = vmatpush.bf16.msra.mxu0 0
        %622 = vmatpush.bf16.msra.mxu0 %v613
        %623 = vmatpush.bf16.msra.mxu0 %v612
        %624 = vmatmul.bf16.gmra.mxu0 %v564
        %v625 = vpop.f32.mrf.mxu0
        %v626 = vadd.f32 %v545, %v625
        %v627 = vpop.f32.mrf.mxu0
        %628 = vdwg.mxu0
        %v633 = vunpack.c.l.b16 %v531
        %v634 = vunpack.c.l.b16 %v532
        %v635 = vunpack.c.l.b16 %v533
        %v636 = vunpack.c.l.b16 %v534
        %v637 = vpack.c.b16 %v634, %v633
        %v638 = vpack.c.b16 %v636, %v635
        %641 = vmatpush.bf16.msra.mxu0 0
        %642 = vmatpush.bf16.msra.mxu0 0
        %643 = vmatpush.bf16.msra.mxu0 0
        %644 = vmatpush.bf16.msra.mxu0 0
        %645 = vmatpush.bf16.msra.mxu0 0
        %646 = vmatpush.bf16.msra.mxu0 0
        %647 = vmatpush.bf16.msra.mxu0 %v638
        %648 = vmatpush.bf16.msra.mxu0 %v637
        %649 = vmatmul.bf16.gmra.mxu0 %v564
        %v650 = vpop.f32.mrf.mxu0
        %v651 = vadd.f32 %v546, %v650
        %v652 = vpop.f32.mrf.mxu0
        %653 = vdwg.mxu0
        %s654 = scalar_lea.vmem %s3, 64
        %v655 = vld [vmem:[%s654] sm:$0xf]
        %v656 = vld [vmem:[%s654 + $0x4] sm:$0xf]
        %v657 = vld [vmem:[%s654 + $0x8] sm:$0xf]
        %v658 = vld [vmem:[%s654 + $0xc] sm:$0xf]
        %v659 = vld [vmem:[%s654 + $0x10] sm:$0xf]
        %v660 = vld [vmem:[%s654 + $0x14] sm:$0xf]
        %v661 = vld [vmem:[%s654 + $0x18] sm:$0xf]
        %v662 = vld [vmem:[%s654 + $0x1c] sm:$0xf]
        %v663 = vld [vmem:[%s654 + $0x20] sm:$0xf]
        %v664 = vld [vmem:[%s654 + $0x24] sm:$0xf]
        %v665 = vld [vmem:[%s654 + $0x28] sm:$0xf]
        %v666 = vld [vmem:[%s654 + $0x2c] sm:$0xf]
        %v667 = vld [vmem:[%s654 + $0x30] sm:$0xf]
        %v668 = vld [vmem:[%s654 + $0x34] sm:$0xf]
        %v669 = vld [vmem:[%s654 + $0x38] sm:$0xf]
        %v670 = vld [vmem:[%s654 + $0x3c] sm:$0xf]
        %s671 = scalar_lea.vmem %s4, 4
        %v672 = vld [vmem:[%s671] sm:$0x1]
        %v673 = vld [vmem:[%s671 + $0x1] sm:$0x1]
        %v674 = vld [vmem:[%s671 + $0x2] sm:$0x1]
        %v675 = vld [vmem:[%s671 + $0x3] sm:$0x1]
        %v680 = vperm.slane %v672, 0
        %v681 = vperm.slane %v673, 0
        %v682 = vperm.slane %v674, 0
        %v683 = vperm.slane %v675, 0
        %v692 = vunpack.c.l.b16 %v655
        %v693 = vunpack.c.l.b16 %v656
        %v694 = vunpack.c.l.b16 %v657
        %v695 = vunpack.c.l.b16 %v658
        %v696 = vpack.c.b16 %v693, %v692
        %v697 = vpack.c.b16 %v695, %v694
        %700 = vmatpush.bf16.msra.mxu0 0
        %701 = vmatpush.bf16.msra.mxu0 0
        %702 = vmatpush.bf16.msra.mxu0 0
        %703 = vmatpush.bf16.msra.mxu0 0
        %704 = vmatpush.bf16.msra.mxu0 0
        %705 = vmatpush.bf16.msra.mxu0 0
        %706 = vmatpush.bf16.msra.mxu0 %v697
        %707 = vmatpush.bf16.msra.mxu0 %v696
        %708 = vmatmul.bf16.gmra.mxu0 %v564
        %v709 = vpop.f32.mrf.mxu0
        %v710 = vadd.f32 %v680, %v709
        %v711 = vpop.f32.mrf.mxu0
        %712 = vdwg.mxu0
        %v717 = vunpack.c.l.b16 %v659
        %v718 = vunpack.c.l.b16 %v660
        %v719 = vunpack.c.l.b16 %v661
        %v720 = vunpack.c.l.b16 %v662
        %v721 = vpack.c.b16 %v718, %v717
        %v722 = vpack.c.b16 %v720, %v719
        %725 = vmatpush.bf16.msra.mxu0 0
        %726 = vmatpush.bf16.msra.mxu0 0
        %727 = vmatpush.bf16.msra.mxu0 0
        %728 = vmatpush.bf16.msra.mxu0 0
        %729 = vmatpush.bf16.msra.mxu0 0
        %730 = vmatpush.bf16.msra.mxu0 0
        %731 = vmatpush.bf16.msra.mxu0 %v722
        %732 = vmatpush.bf16.msra.mxu0 %v721
        %733 = vmatmul.bf16.gmra.mxu0 %v564
        %v734 = vpop.f32.mrf.mxu0
        %v735 = vadd.f32 %v681, %v734
        %v736 = vpop.f32.mrf.mxu0
        %737 = vdwg.mxu0
        %v742 = vunpack.c.l.b16 %v663
        %v743 = vunpack.c.l.b16 %v664
        %v744 = vunpack.c.l.b16 %v665
        %v745 = vunpack.c.l.b16 %v666
        %v746 = vpack.c.b16 %v743, %v742
        %v747 = vpack.c.b16 %v745, %v744
        %750 = vmatpush.bf16.msra.mxu0 0
        %751 = vmatpush.bf16.msra.mxu0 0
        %752 = vmatpush.bf16.msra.mxu0 0
        %753 = vmatpush.bf16.msra.mxu0 0
        %754 = vmatpush.bf16.msra.mxu0 0
        %755 = vmatpush.bf16.msra.mxu0 0
        %756 = vmatpush.bf16.msra.mxu0 %v747
        %757 = vmatpush.bf16.msra.mxu0 %v746
        %758 = vmatmul.bf16.gmra.mxu0 %v564
        %v759 = vpop.f32.mrf.mxu0
        %v760 = vadd.f32 %v682, %v759
        %v761 = vpop.f32.mrf.mxu0
        %762 = vdwg.mxu0
        %v767 = vunpack.c.l.b16 %v667
        %v768 = vunpack.c.l.b16 %v668
        %v769 = vunpack.c.l.b16 %v669
        %v770 = vunpack.c.l.b16 %v670
        %v771 = vpack.c.b16 %v768, %v767
        %v772 = vpack.c.b16 %v770, %v769
        %775 = vmatpush.bf16.msra.mxu0 0
        %776 = vmatpush.bf16.msra.mxu0 0
        %777 = vmatpush.bf16.msra.mxu0 0
        %778 = vmatpush.bf16.msra.mxu0 0
        %779 = vmatpush.bf16.msra.mxu0 0
        %780 = vmatpush.bf16.msra.mxu0 0
        %781 = vmatpush.bf16.msra.mxu0 %v772
        %782 = vmatpush.bf16.msra.mxu0 %v771
        %783 = vmatmul.bf16.gmra.mxu0 %v564
        %v784 = vpop.f32.mrf.mxu0
        %v785 = vadd.f32 %v683, %v784
        %v786 = vpop.f32.mrf.mxu0
        %787 = vdwg.mxu0
        %s788 = scalar_lea.vmem %s3, 128
        %v789 = vld [vmem:[%s788] sm:$0xf]
        %v790 = vld [vmem:[%s788 + $0x4] sm:$0xf]
        %v791 = vld [vmem:[%s788 + $0x8] sm:$0xf]
        %v792 = vld [vmem:[%s788 + $0xc] sm:$0xf]
        %v793 = vld [vmem:[%s788 + $0x10] sm:$0xf]
        %v794 = vld [vmem:[%s788 + $0x14] sm:$0xf]
        %v795 = vld [vmem:[%s788 + $0x18] sm:$0xf]
        %v796 = vld [vmem:[%s788 + $0x1c] sm:$0xf]
        %v797 = vld [vmem:[%s788 + $0x20] sm:$0xf]
        %v798 = vld [vmem:[%s788 + $0x24] sm:$0xf]
        %v799 = vld [vmem:[%s788 + $0x28] sm:$0xf]
        %v800 = vld [vmem:[%s788 + $0x2c] sm:$0xf]
        %v801 = vld [vmem:[%s788 + $0x30] sm:$0xf]
        %v802 = vld [vmem:[%s788 + $0x34] sm:$0xf]
        %v803 = vld [vmem:[%s788 + $0x38] sm:$0xf]
        %v804 = vld [vmem:[%s788 + $0x3c] sm:$0xf]
        %s805 = scalar_lea.vmem %s4, 8
        %v806 = vld [vmem:[%s805] sm:$0x1]
        %v807 = vld [vmem:[%s805 + $0x1] sm:$0x1]
        %v808 = vld [vmem:[%s805 + $0x2] sm:$0x1]
        %v809 = vld [vmem:[%s805 + $0x3] sm:$0x1]
        %v814 = vperm.slane %v806, 0
        %v815 = vperm.slane %v807, 0
        %v816 = vperm.slane %v808, 0
        %v817 = vperm.slane %v809, 0
        %v826 = vunpack.c.l.b16 %v789
        %v827 = vunpack.c.l.b16 %v790
        %v828 = vunpack.c.l.b16 %v791
        %v829 = vunpack.c.l.b16 %v792
        %v830 = vpack.c.b16 %v827, %v826
        %v831 = vpack.c.b16 %v829, %v828
        %834 = vmatpush.bf16.msra.mxu0 0
        %835 = vmatpush.bf16.msra.mxu0 0
        %836 = vmatpush.bf16.msra.mxu0 0
        %837 = vmatpush.bf16.msra.mxu0 0
        %838 = vmatpush.bf16.msra.mxu0 0
        %839 = vmatpush.bf16.msra.mxu0 0
        %840 = vmatpush.bf16.msra.mxu0 %v831
        %841 = vmatpush.bf16.msra.mxu0 %v830
        %842 = vmatmul.bf16.gmra.mxu0 %v564
        %v843 = vpop.f32.mrf.mxu0
        %v844 = vadd.f32 %v814, %v843
        %v845 = vpop.f32.mrf.mxu0
        %846 = vdwg.mxu0
        %v851 = vunpack.c.l.b16 %v793
        %v852 = vunpack.c.l.b16 %v794
        %v853 = vunpack.c.l.b16 %v795
        %v854 = vunpack.c.l.b16 %v796
        %v855 = vpack.c.b16 %v852, %v851
        %v856 = vpack.c.b16 %v854, %v853
        %859 = vmatpush.bf16.msra.mxu0 0
        %860 = vmatpush.bf16.msra.mxu0 0
        %861 = vmatpush.bf16.msra.mxu0 0
        %862 = vmatpush.bf16.msra.mxu0 0
        %863 = vmatpush.bf16.msra.mxu0 0
        %864 = vmatpush.bf16.msra.mxu0 0
        %865 = vmatpush.bf16.msra.mxu0 %v856
        %866 = vmatpush.bf16.msra.mxu0 %v855
        %867 = vmatmul.bf16.gmra.mxu0 %v564
        %v868 = vpop.f32.mrf.mxu0
        %v869 = vadd.f32 %v815, %v868
        %v870 = vpop.f32.mrf.mxu0
        %871 = vdwg.mxu0
        %v876 = vunpack.c.l.b16 %v797
        %v877 = vunpack.c.l.b16 %v798
        %v878 = vunpack.c.l.b16 %v799
        %v879 = vunpack.c.l.b16 %v800
        %v880 = vpack.c.b16 %v877, %v876
        %v881 = vpack.c.b16 %v879, %v878
        %884 = vmatpush.bf16.msra.mxu0 0
        %885 = vmatpush.bf16.msra.mxu0 0
        %886 = vmatpush.bf16.msra.mxu0 0
        %887 = vmatpush.bf16.msra.mxu0 0
        %888 = vmatpush.bf16.msra.mxu0 0
        %889 = vmatpush.bf16.msra.mxu0 0
        %890 = vmatpush.bf16.msra.mxu0 %v881
        %891 = vmatpush.bf16.msra.mxu0 %v880
        %892 = vmatmul.bf16.gmra.mxu0 %v564
        %v893 = vpop.f32.mrf.mxu0
        %v894 = vadd.f32 %v816, %v893
        %v895 = vpop.f32.mrf.mxu0
        %896 = vdwg.mxu0
        %v901 = vunpack.c.l.b16 %v801
        %v902 = vunpack.c.l.b16 %v802
        %v903 = vunpack.c.l.b16 %v803
        %v904 = vunpack.c.l.b16 %v804
        %v905 = vpack.c.b16 %v902, %v901
        %v906 = vpack.c.b16 %v904, %v903
        %909 = vmatpush.bf16.msra.mxu0 0
        %910 = vmatpush.bf16.msra.mxu0 0
        %911 = vmatpush.bf16.msra.mxu0 0
        %912 = vmatpush.bf16.msra.mxu0 0
        %913 = vmatpush.bf16.msra.mxu0 0
        %914 = vmatpush.bf16.msra.mxu0 0
        %915 = vmatpush.bf16.msra.mxu0 %v906
        %916 = vmatpush.bf16.msra.mxu0 %v905
        %917 = vmatmul.bf16.gmra.mxu0 %v564
        %v918 = vpop.f32.mrf.mxu0
        %v919 = vadd.f32 %v817, %v918
        %v920 = vpop.f32.mrf.mxu0
        %921 = vdwg.mxu0
        %v922 = vpack.c.bf16 %v576, %v576
        %v923 = vpack.c.bf16 %v601, %v601
        %v924 = vpack.c.bf16 %v626, %v626
        %v925 = vpack.c.bf16 %v651, %v651
        %v926 = vpack.c.bf16 %v710, %v710
        %v927 = vpack.c.bf16 %v735, %v735
        %v928 = vpack.c.bf16 %v760, %v760
        %v929 = vpack.c.bf16 %v785, %v785
        %vm930 = vcmask 64512
        %v932 = vsel %vm930, %v922, 0
        %v935 = vsel %vm930, %v926, 0
        %937 = vmatpush.bf16.xpose.msra.mxu0 0
        %938 = vmatpush.bf16.xpose.msra.mxu0 0
        %939 = vmatpush.bf16.xpose.msra.mxu0 0
        %940 = vmatpush.bf16.xpose.msra.mxu0 0
        %941 = vmatpush.bf16.xpose.msra.mxu0 0
        %942 = vmatpush.bf16.xpose.msra.mxu0 0
        %943 = vmatpush.bf16.xpose.msra.mxu0 0
        %944 = vmatpush.bf16.xpose.msra.mxu0 %v935
        %945 = vmatmul.bf16.gmra.mxu0 %v932
        %v946 = vpop.f32.mrf.mxu0
        %v947 = vadd.f32 %v516, %v946
        %v948 = vpop.f32.mrf.mxu0
        %949 = vdwg.mxu0
        %v951 = vsel %vm930, %v923, 0
        %v954 = vsel %vm930, %v927, 0
        %956 = vmatpush.bf16.xpose.msra.mxu0 0
        %957 = vmatpush.bf16.xpose.msra.mxu0 0
        %958 = vmatpush.bf16.xpose.msra.mxu0 0
        %959 = vmatpush.bf16.xpose.msra.mxu0 0
        %960 = vmatpush.bf16.xpose.msra.mxu0 0
        %961 = vmatpush.bf16.xpose.msra.mxu0 0
        %962 = vmatpush.bf16.xpose.msra.mxu0 0
        %963 = vmatpush.bf16.xpose.msra.mxu0 %v954
        %964 = vmatmul.bf16.gmra.mxu0 %v951
        %v965 = vpop.f32.mrf.mxu0
        %v966 = vadd.f32 %v516, %v965
        %v967 = vpop.f32.mrf.mxu0
        %968 = vdwg.mxu0
        %v970 = vsel %vm930, %v924, 0
        %v973 = vsel %vm930, %v928, 0
        %975 = vmatpush.bf16.xpose.msra.mxu0 0
        %976 = vmatpush.bf16.xpose.msra.mxu0 0
        %977 = vmatpush.bf16.xpose.msra.mxu0 0
        %978 = vmatpush.bf16.xpose.msra.mxu0 0
        %979 = vmatpush.bf16.xpose.msra.mxu0 0
        %980 = vmatpush.bf16.xpose.msra.mxu0 0
        %981 = vmatpush.bf16.xpose.msra.mxu0 0
        %982 = vmatpush.bf16.xpose.msra.mxu0 %v973
        %983 = vmatmul.bf16.gmra.mxu0 %v970
        %v984 = vpop.f32.mrf.mxu0
        %v985 = vadd.f32 %v516, %v984
        %v986 = vpop.f32.mrf.mxu0
        %987 = vdwg.mxu0
        %v989 = vsel %vm930, %v925, 0
        %v992 = vsel %vm930, %v929, 0
        %994 = vmatpush.bf16.xpose.msra.mxu0 0
        %995 = vmatpush.bf16.xpose.msra.mxu0 0
        %996 = vmatpush.bf16.xpose.msra.mxu0 0
        %997 = vmatpush.bf16.xpose.msra.mxu0 0
        %998 = vmatpush.bf16.xpose.msra.mxu0 0
        %999 = vmatpush.bf16.xpose.msra.mxu0 0
        %1000 = vmatpush.bf16.xpose.msra.mxu0 0
        %1001 = vmatpush.bf16.xpose.msra.mxu0 %v992
        %1002 = vmatmul.bf16.gmra.mxu0 %v989
        %v1003 = vpop.f32.mrf.mxu0
        %v1004 = vadd.f32 %v516, %v1003
        %v1005 = vpop.f32.mrf.mxu0
        %1006 = vdwg.mxu0
        %v1007 = vsel %vm930, %v947, -inf
        %1008 = vmax.xlane.f32.xlu0 %v1007
        %v1009 = vpop.xlane.xlu0 %1008
        %v1010 = vsel %vm930, %v966, -inf
        %1011 = vmax.xlane.f32.xlu0 %v1010
        %v1012 = vpop.xlane.xlu0 %1011
        %v1013 = vsel %vm930, %v985, -inf
        %1014 = vmax.xlane.f32.xlu0 %v1013
        %v1015 = vpop.xlane.xlu0 %1014
        %v1016 = vsel %vm930, %v1004, -inf
        %1017 = vmax.xlane.f32.xlu0 %v1016
        %v1018 = vpop.xlane.xlu0 %1017
        %v1019 = vsub.f32 %v947, %v1009
        %v1020 = vsub.f32 %v966, %v1012
        %v1021 = vsub.f32 %v985, %v1015
        %v1022 = vsub.f32 %v1004, %v1018
        %v1023 = vmul.f32 %v1019, 1.442695
        %v1024 = vpow.pop %v1023
        %v1025 = vmul.f32 %v1020, 1.442695
        %v1026 = vpow.pop %v1025
        %v1027 = vmul.f32 %v1021, 1.442695
        %v1028 = vpow.pop %v1027
        %v1029 = vmul.f32 %v1022, 1.442695
        %v1030 = vpow.pop %v1029
        %v1031 = vsel %vm930, %v1024, 0.0
        %1032 = vadd.xlane.f32.xlu0 %v1031
        %v1033 = vpop.xlane.xlu0 %1032
        %v1034 = vsel %vm930, %v1026, 0.0
        %1035 = vadd.xlane.f32.xlu0 %v1034
        %v1036 = vpop.xlane.xlu0 %1035
        %v1037 = vsel %vm930, %v1028, 0.0
        %1038 = vadd.xlane.f32.xlu0 %v1037
        %v1039 = vpop.xlane.xlu0 %1038
        %v1040 = vsel %vm930, %v1030, 0.0
        %1041 = vadd.xlane.f32.xlu0 %v1040
        %v1042 = vpop.xlane.xlu0 %1041
        %v1043 = vpack.c.bf16 %v1024, %v1024
        %v1044 = vpack.c.bf16 %v1026, %v1026
        %v1045 = vpack.c.bf16 %v1028, %v1028
        %v1046 = vpack.c.bf16 %v1030, %v1030
        %v1047 = vpack.c.bf16 %v844, %v844
        %v1048 = vpack.c.bf16 %v869, %v869
        %v1049 = vpack.c.bf16 %v894, %v894
        %v1050 = vpack.c.bf16 %v919, %v919
        %v1052 = vsel %vm930, %v1043, 0
        %vm1054 = vcmask 1043456
        %v1056 = vsel %vm1054, %v1047, 0
        %1058 = vmatpush.bf16.msra.mxu0 0
        %1059 = vmatpush.bf16.msra.mxu0 0
        %1060 = vmatpush.bf16.msra.mxu0 0
        %1061 = vmatpush.bf16.msra.mxu0 0
        %1062 = vmatpush.bf16.msra.mxu0 0
        %1063 = vmatpush.bf16.msra.mxu0 0
        %1064 = vmatpush.bf16.msra.mxu0 0
        %1065 = vmatpush.bf16.msra.mxu0 %v1056
        %1066 = vmatmul.bf16.gmra.mxu0 %v1052
        %v1067 = vpop.f32.mrf.mxu0
        %v1068 = vadd.f32 0.0, %v1067
        %v1069 = vpop.f32.mrf.mxu0
        %1070 = vdwg.mxu0
        %v1072 = vsel %vm930, %v1044, 0
        %v1075 = vsel %vm1054, %v1048, 0
        %1077 = vmatpush.bf16.msra.mxu0 0
        %1078 = vmatpush.bf16.msra.mxu0 0
        %1079 = vmatpush.bf16.msra.mxu0 0
        %1080 = vmatpush.bf16.msra.mxu0 0
        %1081 = vmatpush.bf16.msra.mxu0 0
        %1082 = vmatpush.bf16.msra.mxu0 0
        %1083 = vmatpush.bf16.msra.mxu0 0
        %1084 = vmatpush.bf16.msra.mxu0 %v1075
        %1085 = vmatmul.bf16.gmra.mxu0 %v1072
        %v1086 = vpop.f32.mrf.mxu0
        %v1087 = vadd.f32 0.0, %v1086
        %v1088 = vpop.f32.mrf.mxu0
        %1089 = vdwg.mxu0
        %v1091 = vsel %vm930, %v1045, 0
        %v1094 = vsel %vm1054, %v1049, 0
        %1096 = vmatpush.bf16.msra.mxu0 0
        %1097 = vmatpush.bf16.msra.mxu0 0
        %1098 = vmatpush.bf16.msra.mxu0 0
        %1099 = vmatpush.bf16.msra.mxu0 0
        %1100 = vmatpush.bf16.msra.mxu0 0
        %1101 = vmatpush.bf16.msra.mxu0 0
        %1102 = vmatpush.bf16.msra.mxu0 0
        %1103 = vmatpush.bf16.msra.mxu0 %v1094
        %1104 = vmatmul.bf16.gmra.mxu0 %v1091
        %v1105 = vpop.f32.mrf.mxu0
        %v1106 = vadd.f32 0.0, %v1105
        %v1107 = vpop.f32.mrf.mxu0
        %1108 = vdwg.mxu0
        %v1110 = vsel %vm930, %v1046, 0
        %v1113 = vsel %vm1054, %v1050, 0
        %1115 = vmatpush.bf16.msra.mxu0 0
        %1116 = vmatpush.bf16.msra.mxu0 0
        %1117 = vmatpush.bf16.msra.mxu0 0
        %1118 = vmatpush.bf16.msra.mxu0 0
        %1119 = vmatpush.bf16.msra.mxu0 0
        %1120 = vmatpush.bf16.msra.mxu0 0
        %1121 = vmatpush.bf16.msra.mxu0 0
        %1122 = vmatpush.bf16.msra.mxu0 %v1113
        %1123 = vmatmul.bf16.gmra.mxu0 %v1110
        %v1124 = vpop.f32.mrf.mxu0
        %v1125 = vadd.f32 0.0, %v1124
        %v1126 = vpop.f32.mrf.mxu0
        %1127 = vdwg.mxu0
        %v1128 = vrcp.pop %v1033
        %v1129 = vrcp.pop %v1036
        %v1130 = vrcp.pop %v1039
        %v1131 = vrcp.pop %v1042
        %v1132 = vmul.f32 %v1068, %v1128
        %v1133 = vmul.f32 %v1087, %v1129
        %v1134 = vmul.f32 %v1106, %v1130
        %v1135 = vmul.f32 %v1125, %v1131
        %v1136 = vpack.c.bf16 %v1132, %v1132
        %v1137 = vpack.c.bf16 %v1133, %v1133
        %v1138 = vpack.c.bf16 %v1134, %v1134
        %v1139 = vpack.c.bf16 %v1135, %v1135
        %v1140 = vld [vmem:[%s5] sm:$0xf]
        %v1141 = vld [vmem:[%s5 + $0x4] sm:$0xf]
        %v1142 = vld [vmem:[%s5 + $0x8] sm:$0xf]
        %v1143 = vld [vmem:[%s5 + $0xc] sm:$0xf]
        %v1145 = vsel %vm930, %v1136, 0
        %v1148 = vsel %vm1054, %v1140, 0
        %1150 = vmatpush.bf16.msra.mxu0 0
        %1151 = vmatpush.bf16.msra.mxu0 0
        %1152 = vmatpush.bf16.msra.mxu0 0
        %1153 = vmatpush.bf16.msra.mxu0 0
        %1154 = vmatpush.bf16.msra.mxu0 0
        %1155 = vmatpush.bf16.msra.mxu0 0
        %1156 = vmatpush.bf16.msra.mxu0 0
        %1157 = vmatpush.bf16.msra.mxu0 %v1148
        %1158 = vmatmul.bf16.gmra.mxu0 %v1145
        %v1159 = vpop.f32.mrf.mxu0
        %v1160 = vadd.f32 0.0, %v1159
        %v1161 = vpop.f32.mrf.mxu0
        %1162 = vdwg.mxu0
        %v1164 = vsel %vm930, %v1137, 0
        %v1167 = vsel %vm1054, %v1141, 0
        %1169 = vmatpush.bf16.msra.mxu0 0
        %1170 = vmatpush.bf16.msra.mxu0 0
        %1171 = vmatpush.bf16.msra.mxu0 0
        %1172 = vmatpush.bf16.msra.mxu0 0
        %1173 = vmatpush.bf16.msra.mxu0 0
        %1174 = vmatpush.bf16.msra.mxu0 0
        %1175 = vmatpush.bf16.msra.mxu0 0
        %1176 = vmatpush.bf16.msra.mxu0 %v1167
        %1177 = vmatmul.bf16.gmra.mxu0 %v1164
        %v1178 = vpop.f32.mrf.mxu0
        %v1179 = vadd.f32 0.0, %v1178
        %v1180 = vpop.f32.mrf.mxu0
        %1181 = vdwg.mxu0
        %v1183 = vsel %vm930, %v1138, 0
        %v1186 = vsel %vm1054, %v1142, 0
        %1188 = vmatpush.bf16.msra.mxu0 0
        %1189 = vmatpush.bf16.msra.mxu0 0
        %1190 = vmatpush.bf16.msra.mxu0 0
        %1191 = vmatpush.bf16.msra.mxu0 0
        %1192 = vmatpush.bf16.msra.mxu0 0
        %1193 = vmatpush.bf16.msra.mxu0 0
        %1194 = vmatpush.bf16.msra.mxu0 0
        %1195 = vmatpush.bf16.msra.mxu0 %v1186
        %1196 = vmatmul.bf16.gmra.mxu0 %v1183
        %v1197 = vpop.f32.mrf.mxu0
        %v1198 = vadd.f32 0.0, %v1197
        %v1199 = vpop.f32.mrf.mxu0
        %1200 = vdwg.mxu0
        %v1202 = vsel %vm930, %v1139, 0
        %v1205 = vsel %vm1054, %v1143, 0
        %1207 = vmatpush.bf16.msra.mxu0 0
        %1208 = vmatpush.bf16.msra.mxu0 0
        %1209 = vmatpush.bf16.msra.mxu0 0
        %1210 = vmatpush.bf16.msra.mxu0 0
        %1211 = vmatpush.bf16.msra.mxu0 0
        %1212 = vmatpush.bf16.msra.mxu0 0
        %1213 = vmatpush.bf16.msra.mxu0 0
        %1214 = vmatpush.bf16.msra.mxu0 %v1205
        %1215 = vmatmul.bf16.gmra.mxu0 %v1202
        %v1216 = vpop.f32.mrf.mxu0
        %v1217 = vadd.f32 0.0, %v1216
        %v1218 = vpop.f32.mrf.mxu0
        %1219 = vdwg.mxu0
        %v1220 = vsel %vm480, %v1160, 0.0
        %v1221 = vsel %vm480, %v1179, 0.0
        %v1222 = vadd.f32 %v1220, %v1221
        %v1223 = vsel %vm480, %v1198, 0.0
        %v1224 = vadd.f32 %v1222, %v1223
        %v1225 = vsel %vm480, %v1217, 0.0
        %v1226 = vadd.f32 %v1224, %v1225
        %v1227 = vld [vmem:[%s9] sm:$0x3f]
        %v1228 = vadd.f32 %v513, %v1226
        %v1229 = vperm.slane %v1227, 0
        %v1230 = vadd.f32 %v1228, %v1229
        %v1231 = vsel %vm480, %v1230, 0.0
        %1232 = vadd.xlane.f32.xlu0 %v1231
        %v1233 = vpop.xlane.xlu0 %1232
        %v1234 = vmul.f32 %v1233, %v490
        %v1235 = vsub.f32 %v1230, %v1234
        %v1236 = vmul.f32 %v1235, %v1235
        %v1237 = vsel %vm480, %v1236, 0.0
        %1238 = vadd.xlane.f32.xlu0 %v1237
        %v1239 = vpop.xlane.xlu0 %1238
        %v1240 = vmul.f32 %v1239, %v490
        %v1241 = vadd.f32 %v1240, 1e-05
        %v1242 = vrsqrt.pop %v1241
        %v1243 = vmul.f32 %v1242, %v1241
        %v1244 = vmul.f32 %v1243, %v1242
        %v1245 = vmul.f32 0.5, %v1244
        %v1246 = vsub.f32 1.5, %v1245
        %v1247 = vmul.f32 %v1242, %v1246
        %vm1248 = vweird.f32 %v1241
        %vm1249 = vweird.f32 %v1242
        %vm1250 = vmor %vm1248, %vm1249
        %v1251 = vsel %vm1250, %v1242, %v1247
        %v1252 = vmul.f32 %v1235, %v1251
        %v1253 = vperm.slane %v1227, 1
        %v1254 = vmul.f32 %v1252, %v1253
        %v1255 = vperm.slane %v1227, 2
        %v1256 = vadd.f32 %v1254, %v1255
        %v1257 = vpack.c.bf16 %v1256, %v1256
        %v1258 = vld [vmem:[%s6] sm:$0xf]
        %v1259 = vld [vmem:[%s6 + $0x4] sm:$0xf]
        %v1260 = vld [vmem:[%s6 + $0x8] sm:$0xf]
        %v1261 = vld [vmem:[%s6 + $0xc] sm:$0xf]
        %v1262 = vld [vmem:[%s7] sm:$0x1]
        %v1264 = vperm.slane %v1262, 0
        %v1270 = vunpack.c.l.b16 %v1258
        %v1271 = vunpack.c.l.b16 %v1259
        %v1272 = vunpack.c.l.b16 %v1260
        %v1273 = vunpack.c.l.b16 %v1261
        %v1274 = vpack.c.b16 %v1271, %v1270
        %v1275 = vpack.c.b16 %v1273, %v1272
        %v1279 = vsel %vm480, %v1257, 0
        %1281 = vmatpush.bf16.msra.mxu0 0
        %1282 = vmatpush.bf16.msra.mxu0 0
        %1283 = vmatpush.bf16.msra.mxu0 0
        %1284 = vmatpush.bf16.msra.mxu0 0
        %1285 = vmatpush.bf16.msra.mxu0 0
        %1286 = vmatpush.bf16.msra.mxu0 0
        %1287 = vmatpush.bf16.msra.mxu0 %v1275
        %1288 = vmatpush.bf16.msra.mxu0 %v1274
        %1289 = vmatmul.bf16.gmra.mxu0 %v1279
        %v1290 = vpop.f32.mrf.mxu0
        %v1291 = vadd.f32 %v1264, %v1290
        %v1292 = vpop.f32.mrf.mxu0
        %1293 = vdwg.mxu0
        %v1294 = vmul.f32 %v1291, 0.5
        %v1295 = vmul.f32 %v1291, 0.044715
        %v1296 = vmul.f32 %v1295, %v1291
        %v1297 = vmul.f32 %v1296, %v1291
        %v1298 = vadd.f32 %v1291, %v1297
        %v1299 = vmul.f32 %v1298, 0.7978846
        %v1300 = vtanh.pop %v1299
        %v1301 = vadd.f32 %v1300, 1.0
        %v1302 = vmul.f32 %v1294, %v1301
        %v1303 = vpack.c.bf16 %v1302, %v1302
        %v1304 = vld [vmem:[%s8] sm:$0xf]
        %v1305 = vld [vmem:[%s8 + $0x4] sm:$0xf]
        %v1306 = vld [vmem:[%s8 + $0x8] sm:$0xf]
        %v1307 = vld [vmem:[%s8 + $0xc] sm:$0xf]
        %v1308 = vld [vmem:[%s8 + $0x10] sm:$0xf]
        %v1309 = vld [vmem:[%s8 + $0x14] sm:$0xf]
        %v1310 = vld [vmem:[%s8 + $0x18] sm:$0xf]
        %v1311 = vld [vmem:[%s8 + $0x1c] sm:$0xf]
        %v1312 = vperm.slane %v1227, 3
        %v1321 = vunpack.c.l.b16 %v1304
        %v1322 = vunpack.c.l.b16 %v1305
        %v1323 = vunpack.c.l.b16 %v1306
        %v1324 = vunpack.c.l.b16 %v1307
        %v1325 = vunpack.c.l.b16 %v1308
        %v1326 = vunpack.c.l.b16 %v1309
        %v1327 = vunpack.c.l.b16 %v1310
        %v1328 = vunpack.c.l.b16 %v1311
        %v1329 = vpack.c.b16 %v1322, %v1321
        %v1330 = vpack.c.b16 %v1324, %v1323
        %v1331 = vpack.c.b16 %v1326, %v1325
        %v1332 = vpack.c.b16 %v1328, %v1327
        %vm1337 = vcmask 523264
        %v1339 = vsel %vm1337, %v1303, 0
        %1341 = vmatpush.bf16.msra.mxu0 0
        %1342 = vmatpush.bf16.msra.mxu0 0
        %1343 = vmatpush.bf16.msra.mxu0 0
        %1344 = vmatpush.bf16.msra.mxu0 0
        %1345 = vmatpush.bf16.msra.mxu0 %v1332
        %1346 = vmatpush.bf16.msra.mxu0 %v1331
        %1347 = vmatpush.bf16.msra.mxu0 %v1330
        %1348 = vmatpush.bf16.msra.mxu0 %v1329
        %1349 = vmatmul.bf16.gmra.mxu0 %v1339
        %v1350 = vpop.f32.mrf.mxu0
        %v1351 = vadd.f32 %v1312, %v1350
        %v1352 = vpop.f32.mrf.mxu0
        %1353 = vdwg.mxu0
        %v1354 = vadd.f32 %v1256, %v1351
        %v1355 = vsel %vm480, %v1354, 0.0
        %1356 = vadd.xlane.f32.xlu0 %v1355
        %v1357 = vpop.xlane.xlu0 %1356
        %v1358 = vmul.f32 %v1357, %v490
        %v1359 = vsub.f32 %v1354, %v1358
        %v1360 = vmul.f32 %v1359, %v1359
        %v1361 = vsel %vm480, %v1360, 0.0
        %1362 = vadd.xlane.f32.xlu0 %v1361
        %v1363 = vpop.xlane.xlu0 %1362
        %v1364 = vmul.f32 %v1363, %v490
        %v1365 = vadd.f32 %v1364, 1e-05
        %v1366 = vrsqrt.pop %v1365
        %v1367 = vmul.f32 %v1366, %v1365
        %v1368 = vmul.f32 %v1367, %v1366
        %v1369 = vmul.f32 0.5, %v1368
        %v1370 = vsub.f32 1.5, %v1369
        %v1371 = vmul.f32 %v1366, %v1370
        %vm1372 = vweird.f32 %v1365
        %vm1373 = vweird.f32 %v1366
        %vm1374 = vmor %vm1372, %vm1373
        %v1375 = vsel %vm1374, %v1366, %v1371
        %v1376 = vmul.f32 %v1359, %v1375
        %v1377 = vperm.slane %v1227, 4
        %v1378 = vmul.f32 %v1376, %v1377
        %v1379 = vperm.slane %v1227, 5
        %v1380 = vadd.f32 %v1378, %v1379
        %v1381 = vpack.c.bf16 %v1380, %v1380
        %s1382 = scalar_lea.vmem %s3, 192
        %v1383 = vld [vmem:[%s1382] sm:$0xf]
        %v1384 = vld [vmem:[%s1382 + $0x4] sm:$0xf]
        %v1385 = vld [vmem:[%s1382 + $0x8] sm:$0xf]
        %v1386 = vld [vmem:[%s1382 + $0xc] sm:$0xf]
        %v1387 = vld [vmem:[%s1382 + $0x10] sm:$0xf]
        %v1388 = vld [vmem:[%s1382 + $0x14] sm:$0xf]
        %v1389 = vld [vmem:[%s1382 + $0x18] sm:$0xf]
        %v1390 = vld [vmem:[%s1382 + $0x1c] sm:$0xf]
        %v1391 = vld [vmem:[%s1382 + $0x20] sm:$0xf]
        %v1392 = vld [vmem:[%s1382 + $0x24] sm:$0xf]
        %v1393 = vld [vmem:[%s1382 + $0x28] sm:$0xf]
        %v1394 = vld [vmem:[%s1382 + $0x2c] sm:$0xf]
        %v1395 = vld [vmem:[%s1382 + $0x30] sm:$0xf]
        %v1396 = vld [vmem:[%s1382 + $0x34] sm:$0xf]
        %v1397 = vld [vmem:[%s1382 + $0x38] sm:$0xf]
        %v1398 = vld [vmem:[%s1382 + $0x3c] sm:$0xf]
        %s1399 = scalar_lea.vmem %s4, 12
        %v1400 = vld [vmem:[%s1399] sm:$0x1]
        %v1401 = vld [vmem:[%s1399 + $0x1] sm:$0x1]
        %v1402 = vld [vmem:[%s1399 + $0x2] sm:$0x1]
        %v1403 = vld [vmem:[%s1399 + $0x3] sm:$0x1]
        %v1408 = vperm.slane %v1400, 0
        %v1409 = vperm.slane %v1401, 0
        %v1410 = vperm.slane %v1402, 0
        %v1411 = vperm.slane %v1403, 0
        %v1420 = vunpack.c.l.b16 %v1383
        %v1421 = vunpack.c.l.b16 %v1384
        %v1422 = vunpack.c.l.b16 %v1385
        %v1423 = vunpack.c.l.b16 %v1386
        %v1424 = vpack.c.b16 %v1421, %v1420
        %v1425 = vpack.c.b16 %v1423, %v1422
        %v1429 = vsel %vm480, %v1381, 0
        %1431 = vmatpush.bf16.msra.mxu0 0
        %1432 = vmatpush.bf16.msra.mxu0 0
        %1433 = vmatpush.bf16.msra.mxu0 0
        %1434 = vmatpush.bf16.msra.mxu0 0
        %1435 = vmatpush.bf16.msra.mxu0 0
        %1436 = vmatpush.bf16.msra.mxu0 0
        %1437 = vmatpush.bf16.msra.mxu0 %v1425
        %1438 = vmatpush.bf16.msra.mxu0 %v1424
        %1439 = vmatmul.bf16.gmra.mxu0 %v1429
        %v1440 = vpop.f32.mrf.mxu0
        %v1441 = vadd.f32 %v1408, %v1440
        %v1442 = vpop.f32.mrf.mxu0
        %1443 = vdwg.mxu0
        %v1448 = vunpack.c.l.b16 %v1387
        %v1449 = vunpack.c.l.b16 %v1388
        %v1450 = vunpack.c.l.b16 %v1389
        %v1451 = vunpack.c.l.b16 %v1390
        %v1452 = vpack.c.b16 %v1449, %v1448
        %v1453 = vpack.c.b16 %v1451, %v1450
        %1456 = vmatpush.bf16.msra.mxu0 0
        %1457 = vmatpush.bf16.msra.mxu0 0
        %1458 = vmatpush.bf16.msra.mxu0 0
        %1459 = vmatpush.bf16.msra.mxu0 0
        %1460 = vmatpush.bf16.msra.mxu0 0
        %1461 = vmatpush.bf16.msra.mxu0 0
        %1462 = vmatpush.bf16.msra.mxu0 %v1453
        %1463 = vmatpush.bf16.msra.mxu0 %v1452
        %1464 = vmatmul.bf16.gmra.mxu0 %v1429
        %v1465 = vpop.f32.mrf.mxu0
        %v1466 = vadd.f32 %v1409, %v1465
        %v1467 = vpop.f32.mrf.mxu0
        %1468 = vdwg.mxu0
        %v1473 = vunpack.c.l.b16 %v1391
        %v1474 = vunpack.c.l.b16 %v1392
        %v1475 = vunpack.c.l.b16 %v1393
        %v1476 = vunpack.c.l.b16 %v1394
        %v1477 = vpack.c.b16 %v1474, %v1473
        %v1478 = vpack.c.b16 %v1476, %v1475
        %1481 = vmatpush.bf16.msra.mxu0 0
        %1482 = vmatpush.bf16.msra.mxu0 0
        %1483 = vmatpush.bf16.msra.mxu0 0
        %1484 = vmatpush.bf16.msra.mxu0 0
        %1485 = vmatpush.bf16.msra.mxu0 0
        %1486 = vmatpush.bf16.msra.mxu0 0
        %1487 = vmatpush.bf16.msra.mxu0 %v1478
        %1488 = vmatpush.bf16.msra.mxu0 %v1477
        %1489 = vmatmul.bf16.gmra.mxu0 %v1429
        %v1490 = vpop.f32.mrf.mxu0
        %v1491 = vadd.f32 %v1410, %v1490
        %v1492 = vpop.f32.mrf.mxu0
        %1493 = vdwg.mxu0
        %v1498 = vunpack.c.l.b16 %v1395
        %v1499 = vunpack.c.l.b16 %v1396
        %v1500 = vunpack.c.l.b16 %v1397
        %v1501 = vunpack.c.l.b16 %v1398
        %v1502 = vpack.c.b16 %v1499, %v1498
        %v1503 = vpack.c.b16 %v1501, %v1500
        %1506 = vmatpush.bf16.msra.mxu0 0
        %1507 = vmatpush.bf16.msra.mxu0 0
        %1508 = vmatpush.bf16.msra.mxu0 0
        %1509 = vmatpush.bf16.msra.mxu0 0
        %1510 = vmatpush.bf16.msra.mxu0 0
        %1511 = vmatpush.bf16.msra.mxu0 0
        %1512 = vmatpush.bf16.msra.mxu0 %v1503
        %1513 = vmatpush.bf16.msra.mxu0 %v1502
        %1514 = vmatmul.bf16.gmra.mxu0 %v1429
        %v1515 = vpop.f32.mrf.mxu0
        %v1516 = vadd.f32 %v1411, %v1515
        %v1517 = vpop.f32.mrf.mxu0
        %1518 = vdwg.mxu0
        %s1519 = scalar_lea.vmem %s3, 256
        %v1520 = vld [vmem:[%s1519] sm:$0xf]
        %v1521 = vld [vmem:[%s1519 + $0x4] sm:$0xf]
        %v1522 = vld [vmem:[%s1519 + $0x8] sm:$0xf]
        %v1523 = vld [vmem:[%s1519 + $0xc] sm:$0xf]
        %v1524 = vld [vmem:[%s1519 + $0x10] sm:$0xf]
        %v1525 = vld [vmem:[%s1519 + $0x14] sm:$0xf]
        %v1526 = vld [vmem:[%s1519 + $0x18] sm:$0xf]
        %v1527 = vld [vmem:[%s1519 + $0x1c] sm:$0xf]
        %v1528 = vld [vmem:[%s1519 + $0x20] sm:$0xf]
        %v1529 = vld [vmem:[%s1519 + $0x24] sm:$0xf]
        %v1530 = vld [vmem:[%s1519 + $0x28] sm:$0xf]
        %v1531 = vld [vmem:[%s1519 + $0x2c] sm:$0xf]
        %v1532 = vld [vmem:[%s1519 + $0x30] sm:$0xf]
        %v1533 = vld [vmem:[%s1519 + $0x34] sm:$0xf]
        %v1534 = vld [vmem:[%s1519 + $0x38] sm:$0xf]
        %v1535 = vld [vmem:[%s1519 + $0x3c] sm:$0xf]
        %s1536 = scalar_lea.vmem %s4, 16
        %v1537 = vld [vmem:[%s1536] sm:$0x1]
        %v1538 = vld [vmem:[%s1536 + $0x1] sm:$0x1]
        %v1539 = vld [vmem:[%s1536 + $0x2] sm:$0x1]
        %v1540 = vld [vmem:[%s1536 + $0x3] sm:$0x1]
        %v1545 = vperm.slane %v1537, 0
        %v1546 = vperm.slane %v1538, 0
        %v1547 = vperm.slane %v1539, 0
        %v1548 = vperm.slane %v1540, 0
        %v1557 = vunpack.c.l.b16 %v1520
        %v1558 = vunpack.c.l.b16 %v1521
        %v1559 = vunpack.c.l.b16 %v1522
        %v1560 = vunpack.c.l.b16 %v1523
        %v1561 = vpack.c.b16 %v1558, %v1557
        %v1562 = vpack.c.b16 %v1560, %v1559
        %1565 = vmatpush.bf16.msra.mxu0 0
        %1566 = vmatpush.bf16.msra.mxu0 0
        %1567 = vmatpush.bf16.msra.mxu0 0
        %1568 = vmatpush.bf16.msra.mxu0 0
        %1569 = vmatpush.bf16.msra.mxu0 0
        %1570 = vmatpush.bf16.msra.mxu0 0
        %1571 = vmatpush.bf16.msra.mxu0 %v1562
        %1572 = vmatpush.bf16.msra.mxu0 %v1561
        %1573 = vmatmul.bf16.gmra.mxu0 %v1429
        %v1574 = vpop.f32.mrf.mxu0
        %v1575 = vadd.f32 %v1545, %v1574
        %v1576 = vpop.f32.mrf.mxu0
        %1577 = vdwg.mxu0
        %v1582 = vunpack.c.l.b16 %v1524
        %v1583 = vunpack.c.l.b16 %v1525
        %v1584 = vunpack.c.l.b16 %v1526
        %v1585 = vunpack.c.l.b16 %v1527
        %v1586 = vpack.c.b16 %v1583, %v1582
        %v1587 = vpack.c.b16 %v1585, %v1584
        %1590 = vmatpush.bf16.msra.mxu0 0
        %1591 = vmatpush.bf16.msra.mxu0 0
        %1592 = vmatpush.bf16.msra.mxu0 0
        %1593 = vmatpush.bf16.msra.mxu0 0
        %1594 = vmatpush.bf16.msra.mxu0 0
        %1595 = vmatpush.bf16.msra.mxu0 0
        %1596 = vmatpush.bf16.msra.mxu0 %v1587
        %1597 = vmatpush.bf16.msra.mxu0 %v1586
        %1598 = vmatmul.bf16.gmra.mxu0 %v1429
        %v1599 = vpop.f32.mrf.mxu0
        %v1600 = vadd.f32 %v1546, %v1599
        %v1601 = vpop.f32.mrf.mxu0
        %1602 = vdwg.mxu0
        %v1607 = vunpack.c.l.b16 %v1528
        %v1608 = vunpack.c.l.b16 %v1529
        %v1609 = vunpack.c.l.b16 %v1530
        %v1610 = vunpack.c.l.b16 %v1531
        %v1611 = vpack.c.b16 %v1608, %v1607
        %v1612 = vpack.c.b16 %v1610, %v1609
        %1615 = vmatpush.bf16.msra.mxu0 0
        %1616 = vmatpush.bf16.msra.mxu0 0
        %1617 = vmatpush.bf16.msra.mxu0 0
        %1618 = vmatpush.bf16.msra.mxu0 0
        %1619 = vmatpush.bf16.msra.mxu0 0
        %1620 = vmatpush.bf16.msra.mxu0 0
        %1621 = vmatpush.bf16.msra.mxu0 %v1612
        %1622 = vmatpush.bf16.msra.mxu0 %v1611
        %1623 = vmatmul.bf16.gmra.mxu0 %v1429
        %v1624 = vpop.f32.mrf.mxu0
        %v1625 = vadd.f32 %v1547, %v1624
        %v1626 = vpop.f32.mrf.mxu0
        %1627 = vdwg.mxu0
        %v1632 = vunpack.c.l.b16 %v1532
        %v1633 = vunpack.c.l.b16 %v1533
        %v1634 = vunpack.c.l.b16 %v1534
        %v1635 = vunpack.c.l.b16 %v1535
        %v1636 = vpack.c.b16 %v1633, %v1632
        %v1637 = vpack.c.b16 %v1635, %v1634
        %1640 = vmatpush.bf16.msra.mxu0 0
        %1641 = vmatpush.bf16.msra.mxu0 0
        %1642 = vmatpush.bf16.msra.mxu0 0
        %1643 = vmatpush.bf16.msra.mxu0 0
        %1644 = vmatpush.bf16.msra.mxu0 0
        %1645 = vmatpush.bf16.msra.mxu0 0
        %1646 = vmatpush.bf16.msra.mxu0 %v1637
        %1647 = vmatpush.bf16.msra.mxu0 %v1636
        %1648 = vmatmul.bf16.gmra.mxu0 %v1429
        %v1649 = vpop.f32.mrf.mxu0
        %v1650 = vadd.f32 %v1548, %v1649
        %v1651 = vpop.f32.mrf.mxu0
        %1652 = vdwg.mxu0
        %s1653 = scalar_lea.vmem %s3, 320
        %v1654 = vld [vmem:[%s1653] sm:$0xf]
        %v1655 = vld [vmem:[%s1653 + $0x4] sm:$0xf]
        %v1656 = vld [vmem:[%s1653 + $0x8] sm:$0xf]
        %v1657 = vld [vmem:[%s1653 + $0xc] sm:$0xf]
        %v1658 = vld [vmem:[%s1653 + $0x10] sm:$0xf]
        %v1659 = vld [vmem:[%s1653 + $0x14] sm:$0xf]
        %v1660 = vld [vmem:[%s1653 + $0x18] sm:$0xf]
        %v1661 = vld [vmem:[%s1653 + $0x1c] sm:$0xf]
        %v1662 = vld [vmem:[%s1653 + $0x20] sm:$0xf]
        %v1663 = vld [vmem:[%s1653 + $0x24] sm:$0xf]
        %v1664 = vld [vmem:[%s1653 + $0x28] sm:$0xf]
        %v1665 = vld [vmem:[%s1653 + $0x2c] sm:$0xf]
        %v1666 = vld [vmem:[%s1653 + $0x30] sm:$0xf]
        %v1667 = vld [vmem:[%s1653 + $0x34] sm:$0xf]
        %v1668 = vld [vmem:[%s1653 + $0x38] sm:$0xf]
        %v1669 = vld [vmem:[%s1653 + $0x3c] sm:$0xf]
        %s1670 = scalar_lea.vmem %s4, 20
        %v1671 = vld [vmem:[%s1670] sm:$0x1]
        %v1672 = vld [vmem:[%s1670 + $0x1] sm:$0x1]
        %v1673 = vld [vmem:[%s1670 + $0x2] sm:$0x1]
        %v1674 = vld [vmem:[%s1670 + $0x3] sm:$0x1]
        %v1679 = vperm.slane %v1671, 0
        %v1680 = vperm.slane %v1672, 0
        %v1681 = vperm.slane %v1673, 0
        %v1682 = vperm.slane %v1674, 0
        %v1691 = vunpack.c.l.b16 %v1654
        %v1692 = vunpack.c.l.b16 %v1655
        %v1693 = vunpack.c.l.b16 %v1656
        %v1694 = vunpack.c.l.b16 %v1657
        %v1695 = vpack.c.b16 %v1692, %v1691
        %v1696 = vpack.c.b16 %v1694, %v1693
        %1699 = vmatpush.bf16.msra.mxu0 0
        %1700 = vmatpush.bf16.msra.mxu0 0
        %1701 = vmatpush.bf16.msra.mxu0 0
        %1702 = vmatpush.bf16.msra.mxu0 0
        %1703 = vmatpush.bf16.msra.mxu0 0
        %1704 = vmatpush.bf16.msra.mxu0 0
        %1705 = vmatpush.bf16.msra.mxu0 %v1696
        %1706 = vmatpush.bf16.msra.mxu0 %v1695
        %1707 = vmatmul.bf16.gmra.mxu0 %v1429
        %v1708 = vpop.f32.mrf.mxu0
        %v1709 = vadd.f32 %v1679, %v1708
        %v1710 = vpop.f32.mrf.mxu0
        %1711 = vdwg.mxu0
        %v1716 = vunpack.c.l.b16 %v1658
        %v1717 = vunpack.c.l.b16 %v1659
        %v1718 = vunpack.c.l.b16 %v1660
        %v1719 = vunpack.c.l.b16 %v1661
        %v1720 = vpack.c.b16 %v1717, %v1716
        %v1721 = vpack.c.b16 %v1719, %v1718
        %1724 = vmatpush.bf16.msra.mxu0 0
        %1725 = vmatpush.bf16.msra.mxu0 0
        %1726 = vmatpush.bf16.msra.mxu0 0
        %1727 = vmatpush.bf16.msra.mxu0 0
        %1728 = vmatpush.bf16.msra.mxu0 0
        %1729 = vmatpush.bf16.msra.mxu0 0
        %1730 = vmatpush.bf16.msra.mxu0 %v1721
        %1731 = vmatpush.bf16.msra.mxu0 %v1720
        %1732 = vmatmul.bf16.gmra.mxu0 %v1429
        %v1733 = vpop.f32.mrf.mxu0
        %v1734 = vadd.f32 %v1680, %v1733
        %v1735 = vpop.f32.mrf.mxu0
        %1736 = vdwg.mxu0
        %v1741 = vunpack.c.l.b16 %v1662
        %v1742 = vunpack.c.l.b16 %v1663
        %v1743 = vunpack.c.l.b16 %v1664
        %v1744 = vunpack.c.l.b16 %v1665
        %v1745 = vpack.c.b16 %v1742, %v1741
        %v1746 = vpack.c.b16 %v1744, %v1743
        %1749 = vmatpush.bf16.msra.mxu0 0
        %1750 = vmatpush.bf16.msra.mxu0 0
        %1751 = vmatpush.bf16.msra.mxu0 0
        %1752 = vmatpush.bf16.msra.mxu0 0
        %1753 = vmatpush.bf16.msra.mxu0 0
        %1754 = vmatpush.bf16.msra.mxu0 0
        %1755 = vmatpush.bf16.msra.mxu0 %v1746
        %1756 = vmatpush.bf16.msra.mxu0 %v1745
        %1757 = vmatmul.bf16.gmra.mxu0 %v1429
        %v1758 = vpop.f32.mrf.mxu0
        %v1759 = vadd.f32 %v1681, %v1758
        %v1760 = vpop.f32.mrf.mxu0
        %1761 = vdwg.mxu0
        %v1766 = vunpack.c.l.b16 %v1666
        %v1767 = vunpack.c.l.b16 %v1667
        %v1768 = vunpack.c.l.b16 %v1668
        %v1769 = vunpack.c.l.b16 %v1669
        %v1770 = vpack.c.b16 %v1767, %v1766
        %v1771 = vpack.c.b16 %v1769, %v1768
        %1774 = vmatpush.bf16.msra.mxu0 0
        %1775 = vmatpush.bf16.msra.mxu0 0
        %1776 = vmatpush.bf16.msra.mxu0 0
        %1777 = vmatpush.bf16.msra.mxu0 0
        %1778 = vmatpush.bf16.msra.mxu0 0
        %1779 = vmatpush.bf16.msra.mxu0 0
        %1780 = vmatpush.bf16.msra.mxu0 %v1771
        %1781 = vmatpush.bf16.msra.mxu0 %v1770
        %1782 = vmatmul.bf16.gmra.mxu0 %v1429
        %v1783 = vpop.f32.mrf.mxu0
        %v1784 = vadd.f32 %v1682, %v1783
        %v1785 = vpop.f32.mrf.mxu0
        %1786 = vdwg.mxu0
        %v1787 = vpack.c.bf16 %v1441, %v1441
        %v1788 = vpack.c.bf16 %v1466, %v1466
        %v1789 = vpack.c.bf16 %v1491, %v1491
        %v1790 = vpack.c.bf16 %v1516, %v1516
        %v1791 = vpack.c.bf16 %v1575, %v1575
        %v1792 = vpack.c.bf16 %v1600, %v1600
        %v1793 = vpack.c.bf16 %v1625, %v1625
        %v1794 = vpack.c.bf16 %v1650, %v1650
        %v1796 = vsel %vm930, %v1787, 0
        %v1799 = vsel %vm930, %v1791, 0
        %1801 = vmatpush.bf16.xpose.msra.mxu0 0
        %1802 = vmatpush.bf16.xpose.msra.mxu0 0
        %1803 = vmatpush.bf16.xpose.msra.mxu0 0
        %1804 = vmatpush.bf16.xpose.msra.mxu0 0
        %1805 = vmatpush.bf16.xpose.msra.mxu0 0
        %1806 = vmatpush.bf16.xpose.msra.mxu0 0
        %1807 = vmatpush.bf16.xpose.msra.mxu0 0
        %1808 = vmatpush.bf16.xpose.msra.mxu0 %v1799
        %1809 = vmatmul.bf16.gmra.mxu0 %v1796
        %v1810 = vpop.f32.mrf.mxu0
        %v1811 = vadd.f32 %v516, %v1810
        %v1812 = vpop.f32.mrf.mxu0
        %1813 = vdwg.mxu0
        %v1815 = vsel %vm930, %v1788, 0
        %v1818 = vsel %vm930, %v1792, 0
        %1820 = vmatpush.bf16.xpose.msra.mxu0 0
        %1821 = vmatpush.bf16.xpose.msra.mxu0 0
        %1822 = vmatpush.bf16.xpose.msra.mxu0 0
        %1823 = vmatpush.bf16.xpose.msra.mxu0 0
        %1824 = vmatpush.bf16.xpose.msra.mxu0 0
        %1825 = vmatpush.bf16.xpose.msra.mxu0 0
        %1826 = vmatpush.bf16.xpose.msra.mxu0 0
        %1827 = vmatpush.bf16.xpose.msra.mxu0 %v1818
        %1828 = vmatmul.bf16.gmra.mxu0 %v1815
        %v1829 = vpop.f32.mrf.mxu0
        %v1830 = vadd.f32 %v516, %v1829
        %v1831 = vpop.f32.mrf.mxu0
        %1832 = vdwg.mxu0
        %v1834 = vsel %vm930, %v1789, 0
        %v1837 = vsel %vm930, %v1793, 0
        %1839 = vmatpush.bf16.xpose.msra.mxu0 0
        %1840 = vmatpush.bf16.xpose.msra.mxu0 0
        %1841 = vmatpush.bf16.xpose.msra.mxu0 0
        %1842 = vmatpush.bf16.xpose.msra.mxu0 0
        %1843 = vmatpush.bf16.xpose.msra.mxu0 0
        %1844 = vmatpush.bf16.xpose.msra.mxu0 0
        %1845 = vmatpush.bf16.xpose.msra.mxu0 0
        %1846 = vmatpush.bf16.xpose.msra.mxu0 %v1837
        %1847 = vmatmul.bf16.gmra.mxu0 %v1834
        %v1848 = vpop.f32.mrf.mxu0
        %v1849 = vadd.f32 %v516, %v1848
        %v1850 = vpop.f32.mrf.mxu0
        %1851 = vdwg.mxu0
        %v1853 = vsel %vm930, %v1790, 0
        %v1856 = vsel %vm930, %v1794, 0
        %1858 = vmatpush.bf16.xpose.msra.mxu0 0
        %1859 = vmatpush.bf16.xpose.msra.mxu0 0
        %1860 = vmatpush.bf16.xpose.msra.mxu0 0
        %1861 = vmatpush.bf16.xpose.msra.mxu0 0
        %1862 = vmatpush.bf16.xpose.msra.mxu0 0
        %1863 = vmatpush.bf16.xpose.msra.mxu0 0
        %1864 = vmatpush.bf16.xpose.msra.mxu0 0
        %1865 = vmatpush.bf16.xpose.msra.mxu0 %v1856
        %1866 = vmatmul.bf16.gmra.mxu0 %v1853
        %v1867 = vpop.f32.mrf.mxu0
        %v1868 = vadd.f32 %v516, %v1867
        %v1869 = vpop.f32.mrf.mxu0
        %1870 = vdwg.mxu0
        %v1871 = vsel %vm930, %v1811, -inf
        %1872 = vmax.xlane.f32.xlu0 %v1871
        %v1873 = vpop.xlane.xlu0 %1872
        %v1874 = vsel %vm930, %v1830, -inf
        %1875 = vmax.xlane.f32.xlu0 %v1874
        %v1876 = vpop.xlane.xlu0 %1875
        %v1877 = vsel %vm930, %v1849, -inf
        %1878 = vmax.xlane.f32.xlu0 %v1877
        %v1879 = vpop.xlane.xlu0 %1878
        %v1880 = vsel %vm930, %v1868, -inf
        %1881 = vmax.xlane.f32.xlu0 %v1880
        %v1882 = vpop.xlane.xlu0 %1881
        %v1883 = vsub.f32 %v1811, %v1873
        %v1884 = vsub.f32 %v1830, %v1876
        %v1885 = vsub.f32 %v1849, %v1879
        %v1886 = vsub.f32 %v1868, %v1882
        %v1887 = vmul.f32 %v1883, 1.442695
        %v1888 = vpow.pop %v1887
        %v1889 = vmul.f32 %v1884, 1.442695
        %v1890 = vpow.pop %v1889
        %v1891 = vmul.f32 %v1885, 1.442695
        %v1892 = vpow.pop %v1891
        %v1893 = vmul.f32 %v1886, 1.442695
        %v1894 = vpow.pop %v1893
        %v1895 = vsel %vm930, %v1888, 0.0
        %1896 = vadd.xlane.f32.xlu0 %v1895
        %v1897 = vpop.xlane.xlu0 %1896
        %v1898 = vsel %vm930, %v1890, 0.0
        %1899 = vadd.xlane.f32.xlu0 %v1898
        %v1900 = vpop.xlane.xlu0 %1899
        %v1901 = vsel %vm930, %v1892, 0.0
        %1902 = vadd.xlane.f32.xlu0 %v1901
        %v1903 = vpop.xlane.xlu0 %1902
        %v1904 = vsel %vm930, %v1894, 0.0
        %1905 = vadd.xlane.f32.xlu0 %v1904
        %v1906 = vpop.xlane.xlu0 %1905
        %v1907 = vpack.c.bf16 %v1888, %v1888
        %v1908 = vpack.c.bf16 %v1890, %v1890
        %v1909 = vpack.c.bf16 %v1892, %v1892
        %v1910 = vpack.c.bf16 %v1894, %v1894
        %v1911 = vpack.c.bf16 %v1709, %v1709
        %v1912 = vpack.c.bf16 %v1734, %v1734
        %v1913 = vpack.c.bf16 %v1759, %v1759
        %v1914 = vpack.c.bf16 %v1784, %v1784
        %v1916 = vsel %vm930, %v1907, 0
        %v1919 = vsel %vm1054, %v1911, 0
        %1921 = vmatpush.bf16.msra.mxu0 0
        %1922 = vmatpush.bf16.msra.mxu0 0
        %1923 = vmatpush.bf16.msra.mxu0 0
        %1924 = vmatpush.bf16.msra.mxu0 0
        %1925 = vmatpush.bf16.msra.mxu0 0
        %1926 = vmatpush.bf16.msra.mxu0 0
        %1927 = vmatpush.bf16.msra.mxu0 0
        %1928 = vmatpush.bf16.msra.mxu0 %v1919
        %1929 = vmatmul.bf16.gmra.mxu0 %v1916
        %v1930 = vpop.f32.mrf.mxu0
        %v1931 = vadd.f32 0.0, %v1930
        %v1932 = vpop.f32.mrf.mxu0
        %1933 = vdwg.mxu0
        %v1935 = vsel %vm930, %v1908, 0
        %v1938 = vsel %vm1054, %v1912, 0
        %1940 = vmatpush.bf16.msra.mxu0 0
        %1941 = vmatpush.bf16.msra.mxu0 0
        %1942 = vmatpush.bf16.msra.mxu0 0
        %1943 = vmatpush.bf16.msra.mxu0 0
        %1944 = vmatpush.bf16.msra.mxu0 0
        %1945 = vmatpush.bf16.msra.mxu0 0
        %1946 = vmatpush.bf16.msra.mxu0 0
        %1947 = vmatpush.bf16.msra.mxu0 %v1938
        %1948 = vmatmul.bf16.gmra.mxu0 %v1935
        %v1949 = vpop.f32.mrf.mxu0
        %v1950 = vadd.f32 0.0, %v1949
        %v1951 = vpop.f32.mrf.mxu0
        %1952 = vdwg.mxu0
        %v1954 = vsel %vm930, %v1909, 0
        %v1957 = vsel %vm1054, %v1913, 0
        %1959 = vmatpush.bf16.msra.mxu0 0
        %1960 = vmatpush.bf16.msra.mxu0 0
        %1961 = vmatpush.bf16.msra.mxu0 0
        %1962 = vmatpush.bf16.msra.mxu0 0
        %1963 = vmatpush.bf16.msra.mxu0 0
        %1964 = vmatpush.bf16.msra.mxu0 0
        %1965 = vmatpush.bf16.msra.mxu0 0
        %1966 = vmatpush.bf16.msra.mxu0 %v1957
        %1967 = vmatmul.bf16.gmra.mxu0 %v1954
        %v1968 = vpop.f32.mrf.mxu0
        %v1969 = vadd.f32 0.0, %v1968
        %v1970 = vpop.f32.mrf.mxu0
        %1971 = vdwg.mxu0
        %v1973 = vsel %vm930, %v1910, 0
        %v1976 = vsel %vm1054, %v1914, 0
        %1978 = vmatpush.bf16.msra.mxu0 0
        %1979 = vmatpush.bf16.msra.mxu0 0
        %1980 = vmatpush.bf16.msra.mxu0 0
        %1981 = vmatpush.bf16.msra.mxu0 0
        %1982 = vmatpush.bf16.msra.mxu0 0
        %1983 = vmatpush.bf16.msra.mxu0 0
        %1984 = vmatpush.bf16.msra.mxu0 0
        %1985 = vmatpush.bf16.msra.mxu0 %v1976
        %1986 = vmatmul.bf16.gmra.mxu0 %v1973
        %v1987 = vpop.f32.mrf.mxu0
        %v1988 = vadd.f32 0.0, %v1987
        %v1989 = vpop.f32.mrf.mxu0
        %1990 = vdwg.mxu0
        %v1991 = vrcp.pop %v1897
        %v1992 = vrcp.pop %v1900
        %v1993 = vrcp.pop %v1903
        %v1994 = vrcp.pop %v1906
        %v1995 = vmul.f32 %v1931, %v1991
        %v1996 = vmul.f32 %v1950, %v1992
        %v1997 = vmul.f32 %v1969, %v1993
        %v1998 = vmul.f32 %v1988, %v1994
        %v1999 = vpack.c.bf16 %v1995, %v1995
        %v2000 = vpack.c.bf16 %v1996, %v1996
        %v2001 = vpack.c.bf16 %v1997, %v1997
        %v2002 = vpack.c.bf16 %v1998, %v1998
        %s2003 = scalar_lea.vmem %s5, 16
        %v2004 = vld [vmem:[%s2003] sm:$0xf]
        %v2005 = vld [vmem:[%s2003 + $0x4] sm:$0xf]
        %v2006 = vld [vmem:[%s2003 + $0x8] sm:$0xf]
        %v2007 = vld [vmem:[%s2003 + $0xc] sm:$0xf]
        %v2009 = vsel %vm930, %v1999, 0
        %v2012 = vsel %vm1054, %v2004, 0
        %2014 = vmatpush.bf16.msra.mxu0 0
        %2015 = vmatpush.bf16.msra.mxu0 0
        %2016 = vmatpush.bf16.msra.mxu0 0
        %2017 = vmatpush.bf16.msra.mxu0 0
        %2018 = vmatpush.bf16.msra.mxu0 0
        %2019 = vmatpush.bf16.msra.mxu0 0
        %2020 = vmatpush.bf16.msra.mxu0 0
        %2021 = vmatpush.bf16.msra.mxu0 %v2012
        %2022 = vmatmul.bf16.gmra.mxu0 %v2009
        %v2023 = vpop.f32.mrf.mxu0
        %v2024 = vadd.f32 0.0, %v2023
        %v2025 = vpop.f32.mrf.mxu0
        %2026 = vdwg.mxu0
        %v2028 = vsel %vm930, %v2000, 0
        %v2031 = vsel %vm1054, %v2005, 0
        %2033 = vmatpush.bf16.msra.mxu0 0
        %2034 = vmatpush.bf16.msra.mxu0 0
        %2035 = vmatpush.bf16.msra.mxu0 0
        %2036 = vmatpush.bf16.msra.mxu0 0
        %2037 = vmatpush.bf16.msra.mxu0 0
        %2038 = vmatpush.bf16.msra.mxu0 0
        %2039 = vmatpush.bf16.msra.mxu0 0
        %2040 = vmatpush.bf16.msra.mxu0 %v2031
        %2041 = vmatmul.bf16.gmra.mxu0 %v2028
        %v2042 = vpop.f32.mrf.mxu0
        %v2043 = vadd.f32 0.0, %v2042
        %v2044 = vpop.f32.mrf.mxu0
        %2045 = vdwg.mxu0
        %v2047 = vsel %vm930, %v2001, 0
        %v2050 = vsel %vm1054, %v2006, 0
        %2052 = vmatpush.bf16.msra.mxu0 0
        %2053 = vmatpush.bf16.msra.mxu0 0
        %2054 = vmatpush.bf16.msra.mxu0 0
        %2055 = vmatpush.bf16.msra.mxu0 0
        %2056 = vmatpush.bf16.msra.mxu0 0
        %2057 = vmatpush.bf16.msra.mxu0 0
        %2058 = vmatpush.bf16.msra.mxu0 0
        %2059 = vmatpush.bf16.msra.mxu0 %v2050
        %2060 = vmatmul.bf16.gmra.mxu0 %v2047
        %v2061 = vpop.f32.mrf.mxu0
        %v2062 = vadd.f32 0.0, %v2061
        %v2063 = vpop.f32.mrf.mxu0
        %2064 = vdwg.mxu0
        %v2066 = vsel %vm930, %v2002, 0
        %v2069 = vsel %vm1054, %v2007, 0
        %2071 = vmatpush.bf16.msra.mxu0 0
        %2072 = vmatpush.bf16.msra.mxu0 0
        %2073 = vmatpush.bf16.msra.mxu0 0
        %2074 = vmatpush.bf16.msra.mxu0 0
        %2075 = vmatpush.bf16.msra.mxu0 0
        %2076 = vmatpush.bf16.msra.mxu0 0
        %2077 = vmatpush.bf16.msra.mxu0 0
        %2078 = vmatpush.bf16.msra.mxu0 %v2069
        %2079 = vmatmul.bf16.gmra.mxu0 %v2066
        %v2080 = vpop.f32.mrf.mxu0
        %v2081 = vadd.f32 0.0, %v2080
        %v2082 = vpop.f32.mrf.mxu0
        %2083 = vdwg.mxu0
        %v2084 = vsel %vm480, %v2024, 0.0
        %v2085 = vsel %vm480, %v2043, 0.0
        %v2086 = vadd.f32 %v2084, %v2085
        %v2087 = vsel %vm480, %v2062, 0.0
        %v2088 = vadd.f32 %v2086, %v2087
        %v2089 = vsel %vm480, %v2081, 0.0
        %v2090 = vadd.f32 %v2088, %v2089
        %s2091 = scalar_lea.vmem %s9, 8
        %v2092 = vld [vmem:[%s2091] sm:$0x3f]
        %v2093 = vadd.f32 %v1380, %v2090
        %v2094 = vperm.slane %v2092, 0
        %v2095 = vadd.f32 %v2093, %v2094
        %v2096 = vsel %vm480, %v2095, 0.0
        %2097 = vadd.xlane.f32.xlu0 %v2096
        %v2098 = vpop.xlane.xlu0 %2097
        %v2099 = vmul.f32 %v2098, %v490
        %v2100 = vsub.f32 %v2095, %v2099
        %v2101 = vmul.f32 %v2100, %v2100
        %v2102 = vsel %vm480, %v2101, 0.0
        %2103 = vadd.xlane.f32.xlu0 %v2102
        %v2104 = vpop.xlane.xlu0 %2103
        %v2105 = vmul.f32 %v2104, %v490
        %v2106 = vadd.f32 %v2105, 1e-05
        %v2107 = vrsqrt.pop %v2106
        %v2108 = vmul.f32 %v2107, %v2106
        %v2109 = vmul.f32 %v2108, %v2107
        %v2110 = vmul.f32 0.5, %v2109
        %v2111 = vsub.f32 1.5, %v2110
        %v2112 = vmul.f32 %v2107, %v2111
        %vm2113 = vweird.f32 %v2106
        %vm2114 = vweird.f32 %v2107
        %vm2115 = vmor %vm2113, %vm2114
        %v2116 = vsel %vm2115, %v2107, %v2112
        %v2117 = vmul.f32 %v2100, %v2116
        %v2118 = vperm.slane %v2092, 1
        %v2119 = vmul.f32 %v2117, %v2118
        %v2120 = vperm.slane %v2092, 2
        %v2121 = vadd.f32 %v2119, %v2120
        %v2122 = vpack.c.bf16 %v2121, %v2121
        %s2123 = scalar_lea.vmem %s6, 16
        %v2124 = vld [vmem:[%s2123] sm:$0xf]
        %v2125 = vld [vmem:[%s2123 + $0x4] sm:$0xf]
        %v2126 = vld [vmem:[%s2123 + $0x8] sm:$0xf]
        %v2127 = vld [vmem:[%s2123 + $0xc] sm:$0xf]
        %s2128 = scalar_lea.vmem %s7, 1
        %v2129 = vld [vmem:[%s2128] sm:$0x1]
        %v2131 = vperm.slane %v2129, 0
        %v2137 = vunpack.c.l.b16 %v2124
        %v2138 = vunpack.c.l.b16 %v2125
        %v2139 = vunpack.c.l.b16 %v2126
        %v2140 = vunpack.c.l.b16 %v2127
        %v2141 = vpack.c.b16 %v2138, %v2137
        %v2142 = vpack.c.b16 %v2140, %v2139
        %v2146 = vsel %vm480, %v2122, 0
        %2148 = vmatpush.bf16.msra.mxu0 0
        %2149 = vmatpush.bf16.msra.mxu0 0
        %2150 = vmatpush.bf16.msra.mxu0 0
        %2151 = vmatpush.bf16.msra.mxu0 0
        %2152 = vmatpush.bf16.msra.mxu0 0
        %2153 = vmatpush.bf16.msra.mxu0 0
        %2154 = vmatpush.bf16.msra.mxu0 %v2142
        %2155 = vmatpush.bf16.msra.mxu0 %v2141
        %2156 = vmatmul.bf16.gmra.mxu0 %v2146
        %v2157 = vpop.f32.mrf.mxu0
        %v2158 = vadd.f32 %v2131, %v2157
        %v2159 = vpop.f32.mrf.mxu0
        %2160 = vdwg.mxu0
        %v2161 = vmul.f32 %v2158, 0.5
        %v2162 = vmul.f32 %v2158, 0.044715
        %v2163 = vmul.f32 %v2162, %v2158
        %v2164 = vmul.f32 %v2163, %v2158
        %v2165 = vadd.f32 %v2158, %v2164
        %v2166 = vmul.f32 %v2165, 0.7978846
        %v2167 = vtanh.pop %v2166
        %v2168 = vadd.f32 %v2167, 1.0
        %v2169 = vmul.f32 %v2161, %v2168
        %v2170 = vpack.c.bf16 %v2169, %v2169
        %s2171 = scalar_lea.vmem %s8, 32
        %v2172 = vld [vmem:[%s2171] sm:$0xf]
        %v2173 = vld [vmem:[%s2171 + $0x4] sm:$0xf]
        %v2174 = vld [vmem:[%s2171 + $0x8] sm:$0xf]
        %v2175 = vld [vmem:[%s2171 + $0xc] sm:$0xf]
        %v2176 = vld [vmem:[%s2171 + $0x10] sm:$0xf]
        %v2177 = vld [vmem:[%s2171 + $0x14] sm:$0xf]
        %v2178 = vld [vmem:[%s2171 + $0x18] sm:$0xf]
        %v2179 = vld [vmem:[%s2171 + $0x1c] sm:$0xf]
        %v2180 = vperm.slane %v2092, 3
        %v2189 = vunpack.c.l.b16 %v2172
        %v2190 = vunpack.c.l.b16 %v2173
        %v2191 = vunpack.c.l.b16 %v2174
        %v2192 = vunpack.c.l.b16 %v2175
        %v2193 = vunpack.c.l.b16 %v2176
        %v2194 = vunpack.c.l.b16 %v2177
        %v2195 = vunpack.c.l.b16 %v2178
        %v2196 = vunpack.c.l.b16 %v2179
        %v2197 = vpack.c.b16 %v2190, %v2189
        %v2198 = vpack.c.b16 %v2192, %v2191
        %v2199 = vpack.c.b16 %v2194, %v2193
        %v2200 = vpack.c.b16 %v2196, %v2195
        %v2206 = vsel %vm1337, %v2170, 0
        %2208 = vmatpush.bf16.msra.mxu0 0
        %2209 = vmatpush.bf16.msra.mxu0 0
        %2210 = vmatpush.bf16.msra.mxu0 0
        %2211 = vmatpush.bf16.msra.mxu0 0
        %2212 = vmatpush.bf16.msra.mxu0 %v2200
        %2213 = vmatpush.bf16.msra.mxu0 %v2199
        %2214 = vmatpush.bf16.msra.mxu0 %v2198
        %2215 = vmatpush.bf16.msra.mxu0 %v2197
        %2216 = vmatmul.bf16.gmra.mxu0 %v2206
        %v2217 = vpop.f32.mrf.mxu0
        %v2218 = vadd.f32 %v2180, %v2217
        %v2219 = vpop.f32.mrf.mxu0
        %2220 = vdwg.mxu0
        %v2221 = vadd.f32 %v2121, %v2218
        %v2222 = vsel %vm480, %v2221, 0.0
        %2223 = vadd.xlane.f32.xlu0 %v2222
        %v2224 = vpop.xlane.xlu0 %2223
        %v2225 = vmul.f32 %v2224, %v490
        %v2226 = vsub.f32 %v2221, %v2225
        %v2227 = vmul.f32 %v2226, %v2226
        %v2228 = vsel %vm480, %v2227, 0.0
        %2229 = vadd.xlane.f32.xlu0 %v2228
        %v2230 = vpop.xlane.xlu0 %2229
        %v2231 = vmul.f32 %v2230, %v490
        %v2232 = vadd.f32 %v2231, 1e-05
        %v2233 = vrsqrt.pop %v2232
        %v2234 = vmul.f32 %v2233, %v2232
        %v2235 = vmul.f32 %v2234, %v2233
        %v2236 = vmul.f32 0.5, %v2235
        %v2237 = vsub.f32 1.5, %v2236
        %v2238 = vmul.f32 %v2233, %v2237
        %vm2239 = vweird.f32 %v2232
        %vm2240 = vweird.f32 %v2233
        %vm2241 = vmor %vm2239, %vm2240
        %v2242 = vsel %vm2241, %v2233, %v2238
        %v2243 = vmul.f32 %v2226, %v2242
        %v2244 = vperm.slane %v2092, 4
        %v2245 = vmul.f32 %v2243, %v2244
        %v2246 = vperm.slane %v2092, 5
        %v2247 = vadd.f32 %v2245, %v2246
        %v2248 = vpack.c.bf16 %v2247, %v2247
        %v2249 = vld [vmem:[%s10] sm:$0xff]
        %v2250 = vld [vmem:[%s10 + $0x8] sm:$0xff]
        %v2251 = vld [vmem:[%s10 + $0x10] sm:$0xff]
        %v2252 = vld [vmem:[%s10 + $0x18] sm:$0xff]
        %v2253 = vld [vmem:[%s11] sm:$0x3]
        %v2258 = vunpack.c.l.b16 %v2249
        %v2259 = vunpack.c.h.b16 %v2249
        %v2260 = vunpack.c.l.b16 %v2250
        %v2261 = vunpack.c.h.b16 %v2250
        %v2262 = vunpack.c.l.b16 %v2251
        %v2263 = vunpack.c.h.b16 %v2251
        %v2264 = vunpack.c.l.b16 %v2252
        %v2265 = vunpack.c.h.b16 %v2252
        %v2266 = vpack.c.b16 %v2260, %v2258
        %v2267 = vpack.c.b16 %v2261, %v2259
        %v2268 = vpack.c.b16 %v2264, %v2262
        %v2269 = vpack.c.b16 %v2265, %v2263
        %v2275 = vperm.slane %v2253, 0
        %v2276 = vperm.slane %v2253, 1
        %v2280 = vsel %vm480, %v2248, 0
        %2282 = vmatpush.bf16.msra.mxu0 0
        %2283 = vmatpush.bf16.msra.mxu0 0
        %2284 = vmatpush.bf16.msra.mxu0 0
        %2285 = vmatpush.bf16.msra.mxu0 0
        %2286 = vmatpush.bf16.msra.mxu0 0
        %2287 = vmatpush.bf16.msra.mxu0 0
        %2288 = vmatpush.bf16.msra.mxu0 %v2268
        %2289 = vmatpush.bf16.msra.mxu0 %v2266
        %2290 = vmatmul.bf16.gmra.mxu0 %v2280
        %v2291 = vpop.f32.mrf.mxu0
        %v2292 = vadd.f32 %v2275, %v2291
        %v2293 = vpop.f32.mrf.mxu0
        %2294 = vdwg.mxu0
        %2295 = vmatpush.bf16.msra.mxu0 0
        %2296 = vmatpush.bf16.msra.mxu0 0
        %2297 = vmatpush.bf16.msra.mxu0 0
        %2298 = vmatpush.bf16.msra.mxu0 0
        %2299 = vmatpush.bf16.msra.mxu0 0
        %2300 = vmatpush.bf16.msra.mxu0 0
        %2301 = vmatpush.bf16.msra.mxu0 %v2269
        %2302 = vmatpush.bf16.msra.mxu0 %v2267
        %2303 = vmatmul.bf16.gmra.mxu0 %v2280
        %v2304 = vpop.f32.mrf.mxu0
        %v2305 = vadd.f32 %v2276, %v2304
        %v2306 = vpop.f32.mrf.mxu0
        %2307 = vdwg.mxu0
        %v2308 = vmax.f32 %v2292, 0.0
        %v2309 = vmax.f32 %v2305, 0.0
        %v2310 = vpack.c.bf16 %v2308, %v2308
        %v2311 = vpack.c.bf16 %v2309, %v2309
        %v2312 = vld [vmem:[%s12] sm:$0xf]
        %v2313 = vld [vmem:[%s12 + $0x4] sm:$0xf]
        %v2314 = vld [vmem:[%s12 + $0x8] sm:$0xf]
        %v2315 = vld [vmem:[%s12 + $0xc] sm:$0xf]
        %v2316 = vld [vmem:[%s12 + $0x10] sm:$0xf]
        %v2317 = vld [vmem:[%s12 + $0x14] sm:$0xf]
        %v2318 = vld [vmem:[%s12 + $0x18] sm:$0xf]
        %v2319 = vld [vmem:[%s12 + $0x1c] sm:$0xf]
        %v2320 = vld [vmem:[%s12 + $0x20] sm:$0xf]
        %v2321 = vld [vmem:[%s12 + $0x24] sm:$0xf]
        %v2322 = vld [vmem:[%s12 + $0x28] sm:$0xf]
        %v2323 = vld [vmem:[%s12 + $0x2c] sm:$0xf]
        %v2324 = vld [vmem:[%s12 + $0x30] sm:$0xf]
        %v2325 = vld [vmem:[%s12 + $0x34] sm:$0xf]
        %v2326 = vld [vmem:[%s12 + $0x38] sm:$0xf]
        %v2327 = vld [vmem:[%s12 + $0x3c] sm:$0xf]
        %v2328 = vld [vmem:[%s12 + $0x40] sm:$0xf]
        %v2329 = vld [vmem:[%s12 + $0x44] sm:$0xf]
        %v2330 = vld [vmem:[%s12 + $0x48] sm:$0xf]
        %v2331 = vld [vmem:[%s12 + $0x4c] sm:$0xf]
        %v2332 = vld [vmem:[%s12 + $0x50] sm:$0xf]
        %v2333 = vld [vmem:[%s12 + $0x54] sm:$0xf]
        %v2334 = vld [vmem:[%s12 + $0x58] sm:$0xf]
        %v2335 = vld [vmem:[%s12 + $0x5c] sm:$0xf]
        %v2336 = vld [vmem:[%s12 + $0x60] sm:$0xf]
        %v2337 = vld [vmem:[%s12 + $0x64] sm:$0xf]
        %v2338 = vld [vmem:[%s12 + $0x68] sm:$0xf]
        %v2339 = vld [vmem:[%s12 + $0x6c] sm:$0xf]
        %v2340 = vld [vmem:[%s12 + $0x70] sm:$0xf]
        %v2341 = vld [vmem:[%s12 + $0x74] sm:$0xf]
        %v2342 = vld [vmem:[%s12 + $0x78] sm:$0xf]
        %v2343 = vld [vmem:[%s12 + $0x7c] sm:$0xf]
        %v2344 = vld [vmem:[%s13] sm:$0x1]
        %v2377 = vunpack.c.l.b16 %v2312
        %v2378 = vunpack.c.l.b16 %v2313
        %v2379 = vunpack.c.l.b16 %v2314
        %v2380 = vunpack.c.l.b16 %v2315
        %v2381 = vunpack.c.l.b16 %v2316
        %v2382 = vunpack.c.l.b16 %v2317
        %v2383 = vunpack.c.l.b16 %v2318
        %v2384 = vunpack.c.l.b16 %v2319
        %v2385 = vunpack.c.l.b16 %v2320
        %v2386 = vunpack.c.l.b16 %v2321
        %v2387 = vunpack.c.l.b16 %v2322
        %v2388 = vunpack.c.l.b16 %v2323
        %v2389 = vunpack.c.l.b16 %v2324
        %v2390 = vunpack.c.l.b16 %v2325
        %v2391 = vunpack.c.l.b16 %v2326
        %v2392 = vunpack.c.l.b16 %v2327
        %v2393 = vunpack.c.l.b16 %v2328
        %v2394 = vunpack.c.l.b16 %v2329
        %v2395 = vunpack.c.l.b16 %v2330
        %v2396 = vunpack.c.l.b16 %v2331
        %v2397 = vunpack.c.l.b16 %v2332
        %v2398 = vunpack.c.l.b16 %v2333
        %v2399 = vunpack.c.l.b16 %v2334
        %v2400 = vunpack.c.l.b16 %v2335
        %v2401 = vunpack.c.l.b16 %v2336
        %v2402 = vunpack.c.l.b16 %v2337
        %v2403 = vunpack.c.l.b16 %v2338
        %v2404 = vunpack.c.l.b16 %v2339
        %v2405 = vunpack.c.l.b16 %v2340
        %v2406 = vunpack.c.l.b16 %v2341
        %v2407 = vunpack.c.l.b16 %v2342
        %v2408 = vunpack.c.l.b16 %v2343
        %v2409 = vpack.c.b16 %v2378, %v2377
        %v2410 = vpack.c.b16 %v2380, %v2379
        %v2411 = vpack.c.b16 %v2382, %v2381
        %v2412 = vpack.c.b16 %v2384, %v2383
        %v2413 = vpack.c.b16 %v2386, %v2385
        %v2414 = vpack.c.b16 %v2388, %v2387
        %v2415 = vpack.c.b16 %v2390, %v2389
        %v2416 = vpack.c.b16 %v2392, %v2391
        %v2417 = vpack.c.b16 %v2394, %v2393
        %v2418 = vpack.c.b16 %v2396, %v2395
        %v2419 = vpack.c.b16 %v2398, %v2397
        %v2420 = vpack.c.b16 %v2400, %v2399
        %v2421 = vpack.c.b16 %v2402, %v2401
        %v2422 = vpack.c.b16 %v2404, %v2403
        %v2423 = vpack.c.b16 %v2406, %v2405
        %v2424 = vpack.c.b16 %v2408, %v2407
        %2441 = vmatpush.bf16.msra.mxu0 %v2416
        %2442 = vmatpush.bf16.msra.mxu0 %v2415
        %2443 = vmatpush.bf16.msra.mxu0 %v2414
        %2444 = vmatpush.bf16.msra.mxu0 %v2413
        %2445 = vmatpush.bf16.msra.mxu0 %v2412
        %2446 = vmatpush.bf16.msra.mxu0 %v2411
        %2447 = vmatpush.bf16.msra.mxu0 %v2410
        %2448 = vmatpush.bf16.msra.mxu0 %v2409
        %2449 = vmatmul.bf16.gmra.mxu0 %v2310
        %v2450 = vpop.f32.mrf.mxu0
        %v2451 = vadd.f32 %v2344, %v2450
        %v2452 = vpop.f32.mrf.mxu0
        %2453 = vdwg.mxu0
        %2454 = vmatpush.bf16.msra.mxu0 %v2424
        %2455 = vmatpush.bf16.msra.mxu0 %v2423
        %2456 = vmatpush.bf16.msra.mxu0 %v2422
        %2457 = vmatpush.bf16.msra.mxu0 %v2421
        %2458 = vmatpush.bf16.msra.mxu0 %v2420
        %2459 = vmatpush.bf16.msra.mxu0 %v2419
        %2460 = vmatpush.bf16.msra.mxu0 %v2418
        %2461 = vmatpush.bf16.msra.mxu0 %v2417
        %2462 = vmatmul.bf16.gmra.mxu0 %v2311
        %v2463 = vpop.f32.mrf.mxu0
        %v2464 = vadd.f32 %v2451, %v2463
        %v2465 = vpop.f32.mrf.mxu0
        %2466 = vdwg.mxu0
        %v2467 = vsub.f32 0.0, %v2464
        %v2468 = vmul.f32 %v2467, 1.442695
        %v2469 = vpow.pop %v2468
        %v2470 = vadd.f32 %v2469, 1.0
        %v2471 = vrcp.pop %v2470
        %v2472 = vmul.f32 %v2470, %v2471
        %v2473 = vsub.f32 1.0, %v2472
        %v2474 = vmul.f32 %v2471, %v2473
        %v2475 = vadd.f32 %v2471, %v2474
        %vm2476 = vweird.f32 %v2470
        %vm2477 = vweird.f32 %v2471
        %vm2478 = vmor %vm2476, %vm2477
        %v2479 = vsel %vm2478, %v2471, %v2475
        %v2480 = vand.u32 2147483647, %v2470
        %vm2481 = vcmp.eq.f32.partialorder %v2480, 8.507059e+37
        %v2482 = vand.u32 %v2470, 2147483648
        %v2483 = vor.u32 1.1754944e-38, %v2482
        %v2484 = vsel %vm2481, %v2483, %v2479
        %v2485 = vmul.f32 1.0, %v2484
        %2486 = vst [vmem:[%s468] sm:$0x1] %v2485
        %s2487 = sand.u32 %s340, 1
        %s2488 = scalar_lea.sflag [#allocation3], %s2487
        %s2489 = sand.u32 %s340, 1
        %s2490 = scalar_lea.vmem [#allocation2], %s2489
        // Predicated region
        $region77: #{tpu_custom_call.1} parent=75 // pred_check
          %p2491 = pneg %p350
        $region78: #{tpu_custom_call.1} parent=75 // pred_check_branch
          %2493 = sbr.rel (%p2491) target = $region80
        $region79: #{tpu_custom_call.1} parent=75 // pred_region
          %2495 = vsyncadd %s2488, 0
          %s2496 = scalar_lea.hbm %s14, %s28
          %s2498 = sshll.u32 %s2490, 4
          %s2499 = int_to_ptr.vmem [resolvable:$true] %s2498
          %s2500 = sshll.u32 %s2496, 4
          %s2501 = int_to_ptr.hbm [resolvable:$true] %s2500
          %2503 = dma.vmem_to_hbm [thread:$0]  %s2499, 16, %s2501, %s2488
        $region80: #{tpu_custom_call.1} parent=75 // pred_fallthru
          _
      $region76: #{tpu_custom_call.1} parent=5 // pred_fallthru
        _
      %p2504 = scmp.le.s32.totalorder 2, %s23
      // Predicated region
      $region81: #{tpu_custom_call.1} parent=5 // pred_check
        %p2505 = pneg %p2504
      $region82: #{tpu_custom_call.1} parent=5 // pred_check_branch
        %2507 = sbr.rel (%p2505) target = $region84
      $region83: #{tpu_custom_call.1} parent=5 // pred_region
        %s2508 = ssub.s32 %s23, 2
        // Predicated region
        $region85: #{tpu_custom_call.1} parent=83 // pred_check
          %p2509 = pneg %p356
        $region86: #{tpu_custom_call.1} parent=83 // pred_check_branch
          %2511 = sbr.rel (%p2509) target = $region88
        $region87: #{tpu_custom_call.1} parent=83 // pred_region
          %s2512 = sand.u32 %s341, 1
          %s2513 = scalar_lea.sflag [#allocation3], %s2512
          %s2514 = sand.u32 %s341, 1
          %s2515 = scalar_lea.vmem [#allocation2], %s2514
          %2517 = dma.done %s2513, 16
        $region88: #{tpu_custom_call.1} parent=83 // pred_fallthru
          _
      $region84: #{tpu_custom_call.1} parent=5 // pred_fallthru
        _
    $region6: #{tpu_custom_call.1} parent=1 // loop_footer
      %s27 = sadd.s32 1, %s23
    $region7: #{tpu_custom_call.1} parent=1 // loop_footer_branch
      %22 = sbr.rel target = $region3
    $region8: #{tpu_custom_call.1} parent=1 // loop_exit
      _
    %2518 = vsyncpa [#allocation3], 1
    %s2519 = scalar_lea.sflag [#allocation3], 1
    %2520 = vsyncpa %s2519, 1

</llo_original>
